<compile_context>
chip_gen: v5e
topology: v5e:2x2
jax: 0.10.0
libtpu: 0.0.40
codegen_flags: <defaults>
</compile_context>

<pallas_src>
import functools

import jax
import jax.numpy as jnp
from jax.experimental import pallas as pl
from jax.experimental.pallas import tpu as pltpu


# ----------------------------------------------------------------------------
# Kernels
# ----------------------------------------------------------------------------
def _attn_pool_project_kernel(x_ref, wq_ref, bq_ref, wk_ref, bk_ref,
                              wv_ref, bv_ref, sel_ref, out_ref,
                              k_s, v_s, *, S, block_q, mm_dtype):
    """One grid step = (batch element b, query tile qi).  K/V projected in-kernel.

    x_ref   : (1, Sp, C)  f32       full (padded) spatial extent, DMA'd once per b
    wq/wk/wv: (C, C)      mm_dtype  transposed 1x1-conv weights (W^T)
    bq/bk/bv: (1, C)      f32
    sel_ref : (Cout, C)   mm_dtype  0/1 grouped-sum selection matrix
    out_ref : (1, Cout, Tq) f32     lane-dense pooled output block
    k_s/v_s : (Sp, C)     mm_dtype  VMEM scratch, filled once per batch element
    """
    qi = pl.program_id(1)
    Sp, C = k_s.shape
    exact = jnp.dtype(mm_dtype) == jnp.dtype(jnp.float32)

    # ---- once per batch element: K and V projections into VMEM scratch -----
    # (separate matmuls -> no lane-misaligned column slicing of a fused result)
    @pl.when(qi == 0)
    def _project_kv():
        xb = x_ref[0].astype(mm_dtype)                                   # (Sp, C)
        k_s[...] = (jnp.dot(xb, wk_ref[...],
                            preferred_element_type=jnp.float32)
                    + bk_ref[...]).astype(mm_dtype)
        v_s[...] = (jnp.dot(xb, wv_ref[...],
                            preferred_element_type=jnp.float32)
                    + bv_ref[...]).astype(mm_dtype)

    # ---- per-tile Q projection (x is already resident; no extra HBM stream) -
    row0 = pl.multiple_of(qi * block_q, block_q)
    x_tile = x_ref[0, pl.ds(row0, block_q), :]                           # (Tq, C) f32
    q = (jnp.dot(x_tile.astype(mm_dtype), wq_ref[...],
                 preferred_element_type=jnp.float32)
         + bq_ref[...])                                                  # (Tq, C) f32

    # ---- attention for this query tile (no (S, S) materialization) ---------
    scores = jax.lax.dot_general(
        q.astype(mm_dtype), k_s[...], (((1,), (1,)), ((), ())),
        preferred_element_type=jnp.float32)                              # (Tq, Sp) f32
    if Sp != S:  # static: mask padded key columns
        col = jax.lax.broadcasted_iota(jnp.int32, scores.shape, 1)
        scores = jnp.where(col < S, scores, -jnp.inf)

    m = jnp.max(scores, axis=-1, keepdims=True)                          # (Tq, 1)
    p = jnp.exp(scores - m)                                              # (Tq, Sp) f32
    denom = jnp.sum(p, axis=-1, keepdims=True)                           # (Tq, 1)

    wv = jnp.dot(p.astype(mm_dtype), v_s[...],
                 preferred_element_type=jnp.float32)                     # (Tq, C) f32
    wv = wv * pl.reciprocal(denom, approx=not exact)                     # normalize

    # ---- grouped channel pooling, emitted lane-dense as (Cout, Tq) ---------
    prod = (x_tile * wv).astype(mm_dtype)                                # (Tq, C)
    pooled = jax.lax.dot_general(
        sel_ref[...], prod, (((1,), (1,)), ((), ())),
        preferred_element_type=jnp.float32)                              # (Cout, Tq)
    out_ref[0] = pooled.astype(out_ref.dtype)


def _attn_pool_hoisted_kernel(x_ref, k_ref, v_ref, wq_ref, bq_ref, sel_ref,
                              out_ref, *, S, mm_dtype):
    """Variant with K/V projected outside the kernel (v7x small-batch path).

    x_ref : (1, Tq, C)  f32       query tile of x
    k_ref : (1, Sp, C)  mm_dtype  precomputed keys   (resident per batch elem)
    v_ref : (1, Sp, C)  mm_dtype  precomputed values (resident per batch elem)
    No scratch / no cross-step dependency -> both grid axes can be "parallel".
    """
    Sp = k_ref.shape[1]
    exact = jnp.dtype(mm_dtype) == jnp.dtype(jnp.float32)

    x_tile = x_ref[0]                                                    # (Tq, C) f32
    q = (jnp.dot(x_tile.astype(mm_dtype), wq_ref[...],
                 preferred_element_type=jnp.float32)
         + bq_ref[...])                                                  # (Tq, C) f32

    scores = jax.lax.dot_general(
        q.astype(mm_dtype), k_ref[0], (((1,), (1,)), ((), ())),
        preferred_element_type=jnp.float32)                              # (Tq, Sp) f32
    if Sp != S:
        col = jax.lax.broadcasted_iota(jnp.int32, scores.shape, 1)
        scores = jnp.where(col < S, scores, -jnp.inf)

    m = jnp.max(scores, axis=-1, keepdims=True)
    p = jnp.exp(scores - m)
    denom = jnp.sum(p, axis=-1, keepdims=True)

    wv = jnp.dot(p.astype(mm_dtype), v_ref[0],
                 preferred_element_type=jnp.float32)
    wv = wv * pl.reciprocal(denom, approx=not exact)

    prod = (x_tile * wv).astype(mm_dtype)
    pooled = jax.lax.dot_general(
        sel_ref[...], prod, (((1,), (1,)), ((), ())),
        preferred_element_type=jnp.float32)
    out_ref[0] = pooled.astype(out_ref.dtype)


# ----------------------------------------------------------------------------
# Wrapper
# ----------------------------------------------------------------------------
def _round_up(x, m):
    return -(-x // m) * m


def _tpu_vmem_capacity_bytes():
    try:
        info = pltpu.get_tpu_info()
        cap = getattr(info, "vmem_capacity_bytes", None)
        if cap:
            return int(cap)
    except Exception:
        pass
    return 128 * 1024 * 1024   # v5e/v6e default assumption


def pack_attention_pooling_params(wq, bq, wk, bk, wv, bv, *, factor,
                                  matmul_dtype=jnp.bfloat16):
    """Pack conv1x1 weights once (hoist out of the per-call hot path)."""
    C = wq.shape[0]
    Cout = C // factor
    sel = (jnp.arange(C)[None, :] // factor
           == jnp.arange(Cout)[:, None]).astype(matmul_dtype)            # (Cout, C)
    return dict(
        wq_t=jnp.asarray(wq).T.astype(matmul_dtype),                     # (C, C)
        wk_t=jnp.asarray(wk).T.astype(matmul_dtype),
        wv_t=jnp.asarray(wv).T.astype(matmul_dtype),
        bq=jnp.asarray(bq).reshape(1, C).astype(jnp.float32),
        bk=jnp.asarray(bk).reshape(1, C).astype(jnp.float32),
        bv=jnp.asarray(bv).reshape(1, C).astype(jnp.float32),
        sel=sel,
    )


def attention_pooling_forward(x, params, *, factor, block_q=None,
                              matmul_dtype=jnp.bfloat16, hoist_kv=None):
    """x: (B, C, H, W) NCHW.  Returns pooled: (B, C // factor, H, W)."""
    B, C, H, W = x.shape
    S = H * W
    Cout = C // factor
    Sp = _round_up(S, 128)               # lane-dense output stores, aligned tiles
    mm_bytes = jnp.dtype(matmul_dtype).itemsize

    # ---- per-generation VMEM budget ----------------------------------------
    vmem_cap = _tpu_vmem_capacity_bytes()
    small_vmem = vmem_cap <= 96 * 1024 * 1024           # v7x-like (64 MiB / core)
    vmem_budget = vmem_cap - max(16 * 1024 * 1024, vmem_cap // 4)  # 96 MiB / 48 MiB

    if hoist_kv is None:
        # v7x has 2 TCs per chip; with B == 1 the "parallel" batch axis cannot
        # feed both, so hoist K/V projection to XLA and parallelize over tiles.
        hoist_kv = bool(small_vmem and B < 2)

    def vmem_estimate(bq_):
        scratch = 0 if hoist_kv else 2 * Sp * C * mm_bytes               # k_s, v_s
        x_buf = 2 * (bq_ if hoist_kv else Sp) * C * 4                    # x dbl-buf
        kv_buf = (2 * 2 * Sp * C * mm_bytes) if hoist_kv else 0          # k/v inputs
        out_buf = 2 * Cout * bq_ * 4
        weights = (3 * C * C + 3 * C + Cout * C) * 4
        temps = 2 * bq_ * Sp * 4 + 6 * bq_ * C * 4                       # scores, p, q...
        return scratch + x_buf + kv_buf + out_buf + weights + temps

    # ---- block_q: biggest 128-multiple tile that divides Sp and fits -------
    if block_q is None:
        cands = (256, 128) if small_vmem else (1024, 512, 256, 128)
        block_q = 128
        for cand in cands:
            if cand <= Sp and Sp % cand == 0 and vmem_estimate(cand) <= vmem_budget:
                block_q = cand
                break
    block_q = min(block_q, Sp)
    if Sp % block_q != 0 or block_q % 128 != 0:
        block_q = 128

    desired = max(32 * 1024 * 1024, int(1.25 * vmem_estimate(block_q)) + (8 << 20))
    vmem_limit = int(max(16 * 1024 * 1024, min(desired, vmem_budget)))

    # ---- cost estimate (helps XLA schedule the wrapper transpose) ----------
    cost = pl.CostEstimate(
        flops=int(2 * B * (3 * Sp * C * C + 2 * Sp * Sp * C + Sp * Cout * C)),
        transcendentals=int(B * Sp * Sp),
        bytes_accessed=int(B * Sp * C * 4 + B * Cout * Sp * 4
                           + (3 * C * C + 3 * C + Cout * C) * 4
                           + (2 * B * Sp * C * mm_bytes if hoist_kv else 0)))

    # single input layout change (tokens-major); output needs no transpose:
    # the kernel writes (B, Cout, Sp) directly (spatial = lane dim).
    x_sc = jnp.transpose(x.reshape(B, C, S), (0, 2, 1)).astype(jnp.float32)
    if Sp != S:
        x_sc = jnp.pad(x_sc, ((0, 0), (0, Sp - S), (0, 0)))

    grid = (B, Sp // block_q)
    p = params

    if hoist_kv:
        # K/V projected by plain XLA matmuls; both grid axes parallel.
        k_sc = (jnp.einsum('bsc,cd->bsd', x_sc, p['wk_t'].astype(jnp.float32))
                + p['bk']).astype(matmul_dtype)
        v_sc = (jnp.einsum('bsc,cd->bsd', x_sc, p['wv_t'].astype(jnp.float32))
                + p['bv']).astype(matmul_dtype)
        pooled_cs = pl.pallas_call(
            functools.partial(_attn_pool_hoisted_kernel, S=S, mm_dtype=matmul_dtype),
            out_shape=jax.ShapeDtypeStruct((B, Cout, Sp), jnp.float32),
            grid_spec=pltpu.PrefetchScalarGridSpec(
                num_scalar_prefetch=0,
                grid=grid,
                in_specs=[
                    pl.BlockSpec((1, block_q, C), lambda b, q: (b, q, 0)),   # x tile
                    pl.BlockSpec((1, Sp, C), lambda b, q: (b, 0, 0)),        # K
                    pl.BlockSpec((1, Sp, C), lambda b, q: (b, 0, 0)),        # V
                    pl.BlockSpec((C, C), lambda b, q: (0, 0)),               # Wq^T
                    pl.BlockSpec((1, C), lambda b, q: (0, 0)),               # bq
                    pl.BlockSpec((Cout, C), lambda b, q: (0, 0)),            # sel
                ],
                out_specs=pl.BlockSpec((1, Cout, block_q), lambda b, q: (b, 0, q)),
            ),
            compiler_params=pltpu.CompilerParams(
                dimension_semantics=("parallel", "parallel"),
                vmem_limit_bytes=vmem_limit),
            cost_estimate=cost,
        )(x_sc, k_sc, v_sc, p['wq_t'], p['bq'], p['sel'])
    else:
        # In-kernel K/V projection: x streamed from HBM once per batch element.
        # NOTE: the qi axis MUST stay "arbitrary" -- the K/V scratch filled at
        # qi == 0 is reused across all query tiles of one batch element.
        kernel = functools.partial(_attn_pool_project_kernel, S=S,
                                   block_q=block_q, mm_dtype=matmul_dtype)
        pooled_cs = pl.pallas_call(
            kernel,
            out_shape=jax.ShapeDtypeStruct((B, Cout, Sp), jnp.float32),
            grid_spec=pltpu.PrefetchScalarGridSpec(
                num_scalar_prefetch=0,
                grid=grid,
                in_specs=[
                    pl.BlockSpec((1, Sp, C), lambda b, q: (b, 0, 0)),        # x (full)
                    pl.BlockSpec((C, C), lambda b, q: (0, 0)),               # Wq^T
                    pl.BlockSpec((1, C), lambda b, q: (0, 0)),               # bq
                    pl.BlockSpec((C, C), lambda b, q: (0, 0)),               # Wk^T
                    pl.BlockSpec((1, C), lambda b, q: (0, 0)),               # bk
                    pl.BlockSpec((C, C), lambda b, q: (0, 0)),               # Wv^T
                    pl.BlockSpec((1, C), lambda b, q: (0, 0)),               # bv
                    pl.BlockSpec((Cout, C), lambda b, q: (0, 0)),            # sel
                ],
                out_specs=pl.BlockSpec((1, Cout, block_q), lambda b, q: (b, 0, q)),
                scratch_shapes=[
                    pltpu.VMEM((Sp, C), matmul_dtype),   # K scratch
                    pltpu.VMEM((Sp, C), matmul_dtype),   # V scratch
                ],
            ),
            compiler_params=pltpu.CompilerParams(
                dimension_semantics=("parallel", "arbitrary"),
                vmem_limit_bytes=vmem_limit),
            cost_estimate=cost,
        )(x_sc, p['wq_t'], p['bq'], p['wk_t'], p['bk'], p['wv_t'], p['bv'], p['sel'])

    if Sp != S:
        pooled_cs = pooled_cs[:, :, :S]
    return pooled_cs.reshape(B, Cout, H, W)     # free reshape, no transpose


@functools.partial(jax.jit,
                   static_argnames=("factor", "block_q", "matmul_dtype", "hoist_kv"))
def learned_channel_self_attention_pooling(x, wq, bq, wk, bk, wv, bv, *,
                                           factor, block_q=None,
                                           matmul_dtype=jnp.bfloat16,
                                           hoist_kv=None):
    # NOTE: in a real model pack_attention_pooling_params would be called once
    # at init; it is inlined here so the public API matches the PyTorch module.
    params = pack_attention_pooling_params(
        wq, bq, wk, bk, wv, bv, factor=factor, matmul_dtype=matmul_dtype)
    return attention_pooling_forward(x, params, factor=factor, block_q=block_q,
                                     matmul_dtype=matmul_dtype, hoist_kv=hoist_kv)


# ----------------------------------------------------------------------------
# Pure-JAX reference (mirrors the PyTorch forward, NCHW)
# ----------------------------------------------------------------------------
def _reference(x, wq, bq, wk, bk, wv, bv, factor):
    B, C, H, W = x.shape
    S = H * W
    Cout = C // factor
    xf = x.reshape(B, C, S)

    def conv1x1(w, b):
        return jnp.einsum('oc,bcs->bos', w, xf) + b[None, :, None]

    q = conv1x1(wq, bq)
    k = conv1x1(wk, bk)
    v = conv1x1(wv, bv)
    query = jnp.transpose(q, (0, 2, 1))                        # (B, S, C)
    scores = jnp.einsum('bic,bcj->bij', query, k)              # (B, S, S)
    weights = jax.nn.softmax(scores, axis=-1)
    weighted = jnp.einsum('bcj,bij->bci', v, weights)          # (B, C, S)
    x_r = xf.reshape(B, Cout, factor, S)
    w_r = weighted.reshape(B, Cout, factor, S)
    return jnp.sum(x_r * w_r, axis=2).reshape(B, Cout, H, W)


if __name__ == "__main__":
    B, C, H, W = 2, 16, 16, 16          # S = 256
    output_dim = 4
    factor = C // output_dim

    key = jax.random.PRNGKey(0)
    kx, kq, kbq, kk, kbk, kv, kbv, kx2 = jax.random.split(key, 8)

    scale = jnp.float32(0.1)
    x = jax.random.normal(kx, (B, C, H, W), dtype=jnp.float32)
    wq = jax.random.normal(kq, (C, C), dtype=jnp.float32) * scale
    bq = jax.random.normal(kbq, (C,), dtype=jnp.float32) * scale
    wk = jax.random.normal(kk, (C, C), dtype=jnp.float32) * scale
    bk = jax.random.normal(kbk, (C,), dtype=jnp.float32) * scale
    wv = jax.random.normal(kv, (C, C), dtype=jnp.float32) * scale
    bv = jax.random.normal(kbv, (C,), dtype=jnp.float32) * scale

    ref = _reference(x, wq, bq, wk, bk, wv, bv, factor)

    # 1) f32 MXU-operand path, explicit multi-tile block_q (tight check,
    #    exact reciprocal on the f32 path).
    out_f32 = jax.block_until_ready(learned_channel_self_attention_pooling(
        x, wq, bq, wk, bk, wv, bv, factor=factor, block_q=128,
        matmul_dtype=jnp.float32))
    assert out_f32.shape == (B, C // factor, H, W)
    assert jnp.allclose(out_f32, ref, atol=2e-3, rtol=2e-3), \
        "f32 kernel mismatch vs reference"

    # 2) default path: bf16 MXU operands (f32 accumulation), auto block_q.
    out_bf16 = jax.block_until_ready(learned_channel_self_attention_pooling(
        x, wq, bq, wk, bk, wv, bv, factor=factor))
    assert out_bf16.shape == (B, C // factor, H, W)
    assert jnp.allclose(out_bf16, ref, atol=1e-1, rtol=1e-1), \
        "bf16 kernel mismatch vs reference"

    # 3) hoisted-K/V variant (v7x small-batch structure), f32 tight check.
    out_hoist = jax.block_until_ready(learned_channel_self_attention_pooling(
        x, wq, bq, wk, bk, wv, bv, factor=factor, block_q=128,
        matmul_dtype=jnp.float32, hoist_kv=True))
    assert jnp.allclose(out_hoist, ref, atol=2e-3, rtol=2e-3), \
        "hoisted-KV kernel mismatch vs reference"

    # 4) non-128-multiple spatial extent -> padded, masked-softmax path.
    H2, W2 = 12, 12                      # S = 144 -> padded to 256
    x2 = jax.random.normal(kx2, (B, C, H2, W2), dtype=jnp.float32)
    ref2 = _reference(x2, wq, bq, wk, bk, wv, bv, factor)
    out2 = jax.block_until_ready(learned_channel_self_attention_pooling(
        x2, wq, bq, wk, bk, wv, bv, factor=factor, matmul_dtype=jnp.float32))
    assert out2.shape == (B, C // factor, H2, W2)
    assert jnp.allclose(out2, ref2, atol=2e-3, rtol=2e-3), \
        "padded/masked kernel mismatch vs reference"

    print("KERNEL_OK")
</pallas_src>

<mosaic_0001>
module attributes {stable_mosaic.version = 11 : i64} {
  func.func @_attn_pool_project_kernel(%arg0: i32, %arg1: i32, %arg2: memref<1x256x16xf32, #tpu.memory_space<vmem>>, %arg3: memref<16x16xf32, #tpu.memory_space<vmem>>, %arg4: memref<1x16xf32, #tpu.memory_space<vmem>>, %arg5: memref<16x16xf32, #tpu.memory_space<vmem>>, %arg6: memref<1x16xf32, #tpu.memory_space<vmem>>, %arg7: memref<16x16xf32, #tpu.memory_space<vmem>>, %arg8: memref<1x16xf32, #tpu.memory_space<vmem>>, %arg9: memref<4x16xf32, #tpu.memory_space<vmem>>, %arg10: memref<1x4x128xf32, #tpu.memory_space<vmem>>, %arg11: memref<256x16xf32, #tpu.memory_space<vmem>>, %arg12: memref<256x16xf32, #tpu.memory_space<vmem>>) attributes {dimension_semantics = [#tpu.dimension_semantics<parallel>, #tpu.dimension_semantics<arbitrary>], iteration_bounds = array<i64: 2, 2>, scalar_prefetch = 0 : i64, scratch_operands = 2 : i64, tpu.core_type = #tpu.core_type<tc>, window_params = [{transform_indices = @transform_0, window_bounds = array<i64: 1, 256, 16>}, {pipeline_mode = #tpu.pipeline_mode<synchronous>, transform_indices = @transform_1, window_bounds = array<i64: 16, 16>}, {pipeline_mode = #tpu.pipeline_mode<synchronous>, transform_indices = @transform_2, window_bounds = array<i64: 1, 16>}, {pipeline_mode = #tpu.pipeline_mode<synchronous>, transform_indices = @transform_3, window_bounds = array<i64: 16, 16>}, {pipeline_mode = #tpu.pipeline_mode<synchronous>, transform_indices = @transform_4, window_bounds = array<i64: 1, 16>}, {pipeline_mode = #tpu.pipeline_mode<synchronous>, transform_indices = @transform_5, window_bounds = array<i64: 16, 16>}, {pipeline_mode = #tpu.pipeline_mode<synchronous>, transform_indices = @transform_6, window_bounds = array<i64: 1, 16>}, {pipeline_mode = #tpu.pipeline_mode<synchronous>, transform_indices = @transform_7, window_bounds = array<i64: 4, 16>}, {transform_indices = @transform_8, window_bounds = array<i64: 1, 4, 128>}]} {
    %c0_i32 = arith.constant 0 : i32
    %0 = arith.cmpi eq, %arg1, %c0_i32 : i32
    %1 = arith.extui %0 : i1 to i32
    %c0_i32_0 = arith.constant 0 : i32
    %2 = arith.cmpi ne, %1, %c0_i32_0 : i32
    scf.if %2 {
      %c0_20 = arith.constant 0 : index
      %c0_21 = arith.constant 0 : index
      %c0_22 = arith.constant 0 : index
      %33 = vector.load %arg2[%c0_20, %c0_21, %c0_22] : memref<1x256x16xf32, #tpu.memory_space<vmem>>, vector<1x256x16xf32>
      %34 = vector.shape_cast %33 : vector<1x256x16xf32> to vector<256x16xf32>
      %c0_23 = arith.constant 0 : index
      %c0_24 = arith.constant 0 : index
      %35 = vector.load %arg5[%c0_23, %c0_24] : memref<16x16xf32, #tpu.memory_space<vmem>>, vector<16x16xf32>
      %cst_25 = arith.constant dense<0.000000e+00> : vector<256x16xf32>
      %36 = tpu.matmul %34, %35, %cst_25 {dimension_numbers = #tpu.dot_dimension_numbers<[1], [0], [0], [1], [0, 0, 1, 1], [], []>} : vector<256x16xf32>, vector<16x16xf32>, vector<256x16xf32> -> vector<256x16xf32>
      %c0_26 = arith.constant 0 : index
      %c0_27 = arith.constant 0 : index
      %37 = vector.load %arg6[%c0_26, %c0_27] : memref<1x16xf32, #tpu.memory_space<vmem>>, vector<1x16xf32>
      %38 = vector.broadcast %37 : vector<1x16xf32> to vector<256x16xf32>
      %39 = arith.addf %36, %38 : vector<256x16xf32>
      %c0_28 = arith.constant 0 : index
      %c0_29 = arith.constant 0 : index
      %40 = vector.load %arg11[%c0_28, %c0_29] : memref<256x16xf32, #tpu.memory_space<vmem>>, vector<256x16xf32>
      tpu.vector_store %arg11[%c0_28, %c0_29], %39 {strides = array<i32>} : memref<256x16xf32, #tpu.memory_space<vmem>>, vector<256x16xf32>,
      %c0_30 = arith.constant 0 : index
      %c0_31 = arith.constant 0 : index
      %41 = vector.load %arg7[%c0_30, %c0_31] : memref<16x16xf32, #tpu.memory_space<vmem>>, vector<16x16xf32>
      %cst_32 = arith.constant dense<0.000000e+00> : vector<256x16xf32>
      %42 = tpu.matmul %34, %41, %cst_32 {dimension_numbers = #tpu.dot_dimension_numbers<[1], [0], [0], [1], [0, 0, 1, 1], [], []>} : vector<256x16xf32>, vector<16x16xf32>, vector<256x16xf32> -> vector<256x16xf32>
      %c0_33 = arith.constant 0 : index
      %c0_34 = arith.constant 0 : index
      %43 = vector.load %arg8[%c0_33, %c0_34] : memref<1x16xf32, #tpu.memory_space<vmem>>, vector<1x16xf32>
      %44 = vector.broadcast %43 : vector<1x16xf32> to vector<256x16xf32>
      %45 = arith.addf %42, %44 : vector<256x16xf32>
      %c0_35 = arith.constant 0 : index
      %c0_36 = arith.constant 0 : index
      %46 = vector.load %arg12[%c0_35, %c0_36] : memref<256x16xf32, #tpu.memory_space<vmem>>, vector<256x16xf32>
      tpu.vector_store %arg12[%c0_35, %c0_36], %45 {strides = array<i32>} : memref<256x16xf32, #tpu.memory_space<vmem>>, vector<256x16xf32>,
    } else {
    }
    %c128_i32 = arith.constant 128 : i32
    %3 = arith.muli %arg1, %c128_i32 : i32
    %4 = tpu.assume_multiple %3, 128 : i32
    %c0 = arith.constant 0 : index
    %5 = arith.index_cast %4 : i32 to index
    %c0_1 = arith.constant 0 : index
    %6 = vector.load %arg2[%c0, %5, %c0_1] : memref<1x256x16xf32, #tpu.memory_space<vmem>>, vector<1x128x16xf32>
    %7 = vector.shape_cast %6 : vector<1x128x16xf32> to vector<128x16xf32>
    %c0_2 = arith.constant 0 : index
    %c0_3 = arith.constant 0 : index
    %8 = vector.load %arg3[%c0_2, %c0_3] : memref<16x16xf32, #tpu.memory_space<vmem>>, vector<16x16xf32>
    %cst = arith.constant dense<0.000000e+00> : vector<128x16xf32>
    %9 = tpu.matmul %7, %8, %cst {dimension_numbers = #tpu.dot_dimension_numbers<[1], [0], [0], [1], [0, 0, 1, 1], [], []>} : vector<128x16xf32>, vector<16x16xf32>, vector<128x16xf32> -> vector<128x16xf32>
    %c0_4 = arith.constant 0 : index
    %c0_5 = arith.constant 0 : index
    %10 = vector.load %arg4[%c0_4, %c0_5] : memref<1x16xf32, #tpu.memory_space<vmem>>, vector<1x16xf32>
    %11 = vector.broadcast %10 : vector<1x16xf32> to vector<128x16xf32>
    %12 = arith.addf %9, %11 : vector<128x16xf32>
    %c0_6 = arith.constant 0 : index
    %c0_7 = arith.constant 0 : index
    %13 = vector.load %arg11[%c0_6, %c0_7] : memref<256x16xf32, #tpu.memory_space<vmem>>, vector<256x16xf32>
    %cst_8 = arith.constant dense<0.000000e+00> : vector<128x256xf32>
    %14 = tpu.matmul %12, %13, %cst_8 {dimension_numbers = #tpu.dot_dimension_numbers<[1], [1], [0], [0], [0, 0, 1, 0], [], []>} : vector<128x16xf32>, vector<256x16xf32>, vector<128x256xf32> -> vector<128x256xf32>
    %cst_9 = arith.constant dense<0xFF800000> : vector<128xf32>
    %15 = vector.multi_reduction <maximumf>, %14, %cst_9 [1] : vector<128x256xf32> to vector<128xf32>
    %16 = vector.shape_cast %15 : vector<128xf32> to vector<128x1xf32>
    %17 = vector.broadcast %16 : vector<128x1xf32> to vector<128x256xf32>
    %18 = arith.subf %14, %17 : vector<128x256xf32>
    %19 = math.exp %18 : vector<128x256xf32>
    %cst_10 = arith.constant dense<0.000000e+00> : vector<128xf32>
    %20 = vector.multi_reduction <add>, %19, %cst_10 [1] : vector<128x256xf32> to vector<128xf32>
    %21 = vector.shape_cast %20 : vector<128xf32> to vector<128x1xf32>
    %c0_11 = arith.constant 0 : index
    %c0_12 = arith.constant 0 : index
    %22 = vector.load %arg12[%c0_11, %c0_12] : memref<256x16xf32, #tpu.memory_space<vmem>>, vector<256x16xf32>
    %cst_13 = arith.constant dense<0.000000e+00> : vector<128x16xf32>
    %23 = tpu.matmul %19, %22, %cst_13 {dimension_numbers = #tpu.dot_dimension_numbers<[1], [0], [0], [1], [0, 0, 1, 1], [], []>} : vector<128x256xf32>, vector<256x16xf32>, vector<128x16xf32> -> vector<128x16xf32>
    %24 = tpu.reciprocal %21 : vector<128x1xf32> -> vector<128x1xf32>
    %25 = vector.broadcast %24 : vector<128x1xf32> to vector<128x16xf32>
    %26 = arith.mulf %23, %25 : vector<128x16xf32>
    %27 = arith.mulf %7, %26 : vector<128x16xf32>
    %c0_14 = arith.constant 0 : index
    %c0_15 = arith.constant 0 : index
    %28 = vector.load %arg9[%c0_14, %c0_15] : memref<4x16xf32, #tpu.memory_space<vmem>>, vector<4x16xf32>
    %cst_16 = arith.constant dense<0.000000e+00> : vector<4x128xf32>
    %29 = tpu.matmul %28, %27, %cst_16 {dimension_numbers = #tpu.dot_dimension_numbers<[1], [1], [0], [0], [0, 0, 1, 0], [], []>} : vector<4x16xf32>, vector<128x16xf32>, vector<4x128xf32> -> vector<4x128xf32>
    %c0_17 = arith.constant 0 : index
    %c0_18 = arith.constant 0 : index
    %c0_19 = arith.constant 0 : index
    %30 = vector.load %arg10[%c0_17, %c0_18, %c0_19] : memref<1x4x128xf32, #tpu.memory_space<vmem>>, vector<1x4x128xf32>
    %31 = vector.shape_cast %30 : vector<1x4x128xf32> to vector<4x128xf32>
    %32 = vector.shape_cast %29 : vector<4x128xf32> to vector<1x4x128xf32>
    tpu.vector_store %arg10[%c0_17, %c0_18, %c0_19], %32 {strides = array<i32>} : memref<1x4x128xf32, #tpu.memory_space<vmem>>, vector<1x4x128xf32>,
    return
  }
  func.func @transform_0(%arg0: i32, %arg1: i32) -> (i32, i32, i32) {
    %c0_i32 = arith.constant 0 : i32
    %c0_i32_0 = arith.constant 0 : i32
    %c0_i32_1 = arith.constant 0 : i32
    return %arg0, %c0_i32, %c0_i32_0 : i32, i32, i32
  }
  func.func @transform_1(%arg0: i32, %arg1: i32) -> (i32, i32) {
    %c0_i32 = arith.constant 0 : i32
    %c0_i32_0 = arith.constant 0 : i32
    %c0_i32_1 = arith.constant 0 : i32
    return %c0_i32, %c0_i32_0 : i32, i32
  }
  func.func @transform_2(%arg0: i32, %arg1: i32) -> (i32, i32) {
    %c0_i32 = arith.constant 0 : i32
    %c0_i32_0 = arith.constant 0 : i32
    %c0_i32_1 = arith.constant 0 : i32
    return %c0_i32, %c0_i32_0 : i32, i32
  }
  func.func @transform_3(%arg0: i32, %arg1: i32) -> (i32, i32) {
    %c0_i32 = arith.constant 0 : i32
    %c0_i32_0 = arith.constant 0 : i32
    %c0_i32_1 = arith.constant 0 : i32
    return %c0_i32, %c0_i32_0 : i32, i32
  }
  func.func @transform_4(%arg0: i32, %arg1: i32) -> (i32, i32) {
    %c0_i32 = arith.constant 0 : i32
    %c0_i32_0 = arith.constant 0 : i32
    %c0_i32_1 = arith.constant 0 : i32
    return %c0_i32, %c0_i32_0 : i32, i32
  }
  func.func @transform_5(%arg0: i32, %arg1: i32) -> (i32, i32) {
    %c0_i32 = arith.constant 0 : i32
    %c0_i32_0 = arith.constant 0 : i32
    %c0_i32_1 = arith.constant 0 : i32
    return %c0_i32, %c0_i32_0 : i32, i32
  }
  func.func @transform_6(%arg0: i32, %arg1: i32) -> (i32, i32) {
    %c0_i32 = arith.constant 0 : i32
    %c0_i32_0 = arith.constant 0 : i32
    %c0_i32_1 = arith.constant 0 : i32
    return %c0_i32, %c0_i32_0 : i32, i32
  }
  func.func @transform_7(%arg0: i32, %arg1: i32) -> (i32, i32) {
    %c0_i32 = arith.constant 0 : i32
    %c0_i32_0 = arith.constant 0 : i32
    %c0_i32_1 = arith.constant 0 : i32
    return %c0_i32, %c0_i32_0 : i32, i32
  }
  func.func @transform_8(%arg0: i32, %arg1: i32) -> (i32, i32, i32) {
    %c0_i32 = arith.constant 0 : i32
    %c0_i32_0 = arith.constant 0 : i32
    return %arg0, %c0_i32, %arg1 : i32, i32, i32
  }
}

</mosaic_0001>

<llo_original>
// kernel: learned_channel_self_attention_pooling.1
$region0: #{learned_channel_self_attention_pooling.1}
  #allocation0 [shape = 'u32[]', space=smem, size = 0x4, offset = 0x4, fixed_abs, tag = 'smem constant byte address 0x4 - core index']
  #allocation1 [shape = 'u32[72,128]{1,0:T(1,128)}', space=vmem, size = 0x9000, scoped, tag = 'internal scratch']
  #allocation2 [shape = 'f32[256,16]{1,0:T(8,128)}', space=vmem, size = 0x20000, scoped, tag = 'scratch operand']
  #allocation3 [shape = 'f32[256,16]{1,0:T(8,128)}', space=vmem, size = 0x20000, scoped, tag = 'scratch operand']
  %s0 = inlined_call_operand.vmem [shape: f32[2,256,16], index: 0, kind: input, shape index: {}]
  %s1 = inlined_call_operand.vmem [shape: f32[16,16], index: 1, kind: input, shape index: {}]
  %s2 = inlined_call_operand.vmem [shape: f32[1,16], index: 2, kind: input, shape index: {}]
  %s3 = inlined_call_operand.vmem [shape: f32[16,16], index: 3, kind: input, shape index: {}]
  %s4 = inlined_call_operand.vmem [shape: f32[1,16], index: 4, kind: input, shape index: {}]
  %s5 = inlined_call_operand.vmem [shape: f32[16,16], index: 5, kind: input, shape index: {}]
  %s6 = inlined_call_operand.vmem [shape: f32[1,16], index: 6, kind: input, shape index: {}]
  %s7 = inlined_call_operand.vmem [shape: f32[4,16], index: 7, kind: input, shape index: {}]
  %s8 = inlined_call_operand.vmem [shape: f32[2,4,256], index: 8, kind: output, shape index: {}]
  %s9 = sld [smem:[#allocation0]]
  $region69: #{learned_channel_self_attention_pooling.1} parent=0
    _
  %s11 = ssub.s32 1, %s9
  %s12 = scalar_select 0, %s11, %s9
  loop: start=0, step=1, limit=6
  $region2: #{learned_channel_self_attention_pooling.1} parent=0 // loop_pre_header
    _
  $region3: #{learned_channel_self_attention_pooling.1} parent=0 // loop_header
    %s14 = sphi 0, %s18
    %p15 = scmp.ge.s32.totalorder %s14, 6
    %s21 = sphi 0, %s33
    %s22 = sphi 0, %s29
    %s23 = sphi 0, %s21
    %s24 = sphi 0, %s22
    %s25 = sphi 0, %s23
    %s26 = sphi 0, %s24
    %s36 = sphi 0, %s38
    %s39 = sphi 0, %s36
    %s40 = sphi 0, %s39
    %s56 = sphi 0, %s40
    %s60 = sphi 0, %s60
    %s62 = sphi 0, %s60
    %s63 = sphi 0, %s62
    %s77 = sphi 0, %s63
    %s81 = sphi 0, %s81
    %s83 = sphi 0, %s81
    %s84 = sphi 0, %s83
    %s98 = sphi 0, %s84
    %s102 = sphi 0, %s102
    %s104 = sphi 0, %s102
    %s105 = sphi 0, %s104
    %s119 = sphi 0, %s105
    %s123 = sphi 0, %s123
    %s125 = sphi 0, %s123
    %s126 = sphi 0, %s125
    %s140 = sphi 0, %s126
    %s144 = sphi 0, %s144
    %s146 = sphi 0, %s144
    %s147 = sphi 0, %s146
    %s161 = sphi 0, %s147
    %s165 = sphi 0, %s165
    %s167 = sphi 0, %s165
    %s168 = sphi 0, %s167
    %s182 = sphi 0, %s168
    %s186 = sphi 0, %s186
    %s188 = sphi 0, %s186
    %s189 = sphi 0, %s188
    %s203 = sphi 0, %s189
    %s211 = sphi 0, %s213
    %s214 = sphi 0, %s211
    %s215 = sphi 0, %s214
    %s231 = sphi 0, %s215
  $region4: #{learned_channel_self_attention_pooling.1} parent=0 // loop_header_branch
    %17 = sbr.rel (%p15) target = $region8
  $region5: #{learned_channel_self_attention_pooling.1} parent=0 // loop_body
    %s19 = ssub.s32 %s14, 1
    %s20 = ssub.s32 %s14, 2
    %s27 = sadd.s32 1, %s22
    %p28 = scmp.ge.s32.totalorder %s27, 2
    %s29 = scalar_select %p28, 0, %s27
    %s30 = sadd.s32 1, %s21
    %s31 = scalar_select %p28, %s30, %s21
    %p32 = scmp.ge.s32.totalorder %s31, 2
    %s33 = scalar_select %p32, 0, %s31
    %s34 = ssub.s32 %s21, %s33
    %p35 = scmp.eq.s32.totalorder %s34, 0
    %s37 = sadd.s32 %s36, 1
    %s38 = scalar_select %p35, %s36, %s37
    %p41 = pneg %p35
    %p42 = scmp.eq.s32.totalorder %s14, 3
    %p43 = por %p41, %p42
    %p44 = scmp.ne.s32.totalorder %s36, %s39
    %p45 = scmp.eq.s32.totalorder %s14, 0
    %p46 = por %p44, %p45
    %p47 = scmp.ne.s32.totalorder %s36, %s39
    %p48 = scmp.eq.s32.totalorder %s19, 3
    %p49 = por %p47, %p48
    %p50 = scmp.ne.s32.totalorder %s39, %s40
    %p51 = scmp.eq.s32.totalorder %s19, 0
    %p52 = por %p50, %p51
    %p53 = scmp.ne.s32.totalorder %s39, %s40
    %p54 = scmp.eq.s32.totalorder %s20, 3
    %p55 = por %p53, %p54
    %p57 = scmp.ne.s32.totalorder %s40, %s56
    %p58 = scmp.eq.s32.totalorder %s20, 0
    %p59 = por %p57, %p58
    %s61 = sadd.s32 %s60, 1
    %p64 = scmp.eq.s32.totalorder %s14, 3
    %p65 = scmp.ne.s32.totalorder %s60, %s62
    %p66 = scmp.eq.s32.totalorder %s14, 0
    %p67 = por %p65, %p66
    %p68 = scmp.ne.s32.totalorder %s60, %s62
    %p69 = scmp.eq.s32.totalorder %s19, 3
    %p70 = por %p68, %p69
    %p71 = scmp.ne.s32.totalorder %s62, %s63
    %p72 = scmp.eq.s32.totalorder %s19, 0
    %p73 = por %p71, %p72
    %p74 = scmp.ne.s32.totalorder %s62, %s63
    %p75 = scmp.eq.s32.totalorder %s20, 3
    %p76 = por %p74, %p75
    %p78 = scmp.ne.s32.totalorder %s63, %s77
    %p79 = scmp.eq.s32.totalorder %s20, 0
    %p80 = por %p78, %p79
    %s82 = sadd.s32 %s81, 1
    %p85 = scmp.eq.s32.totalorder %s14, 3
    %p86 = scmp.ne.s32.totalorder %s81, %s83
    %p87 = scmp.eq.s32.totalorder %s14, 0
    %p88 = por %p86, %p87
    %p89 = scmp.ne.s32.totalorder %s81, %s83
    %p90 = scmp.eq.s32.totalorder %s19, 3
    %p91 = por %p89, %p90
    %p92 = scmp.ne.s32.totalorder %s83, %s84
    %p93 = scmp.eq.s32.totalorder %s19, 0
    %p94 = por %p92, %p93
    %p95 = scmp.ne.s32.totalorder %s83, %s84
    %p96 = scmp.eq.s32.totalorder %s20, 3
    %p97 = por %p95, %p96
    %p99 = scmp.ne.s32.totalorder %s84, %s98
    %p100 = scmp.eq.s32.totalorder %s20, 0
    %p101 = por %p99, %p100
    %s103 = sadd.s32 %s102, 1
    %p106 = scmp.eq.s32.totalorder %s14, 3
    %p107 = scmp.ne.s32.totalorder %s102, %s104
    %p108 = scmp.eq.s32.totalorder %s14, 0
    %p109 = por %p107, %p108
    %p110 = scmp.ne.s32.totalorder %s102, %s104
    %p111 = scmp.eq.s32.totalorder %s19, 3
    %p112 = por %p110, %p111
    %p113 = scmp.ne.s32.totalorder %s104, %s105
    %p114 = scmp.eq.s32.totalorder %s19, 0
    %p115 = por %p113, %p114
    %p116 = scmp.ne.s32.totalorder %s104, %s105
    %p117 = scmp.eq.s32.totalorder %s20, 3
    %p118 = por %p116, %p117
    %p120 = scmp.ne.s32.totalorder %s105, %s119
    %p121 = scmp.eq.s32.totalorder %s20, 0
    %p122 = por %p120, %p121
    %s124 = sadd.s32 %s123, 1
    %p127 = scmp.eq.s32.totalorder %s14, 3
    %p128 = scmp.ne.s32.totalorder %s123, %s125
    %p129 = scmp.eq.s32.totalorder %s14, 0
    %p130 = por %p128, %p129
    %p131 = scmp.ne.s32.totalorder %s123, %s125
    %p132 = scmp.eq.s32.totalorder %s19, 3
    %p133 = por %p131, %p132
    %p134 = scmp.ne.s32.totalorder %s125, %s126
    %p135 = scmp.eq.s32.totalorder %s19, 0
    %p136 = por %p134, %p135
    %p137 = scmp.ne.s32.totalorder %s125, %s126
    %p138 = scmp.eq.s32.totalorder %s20, 3
    %p139 = por %p137, %p138
    %p141 = scmp.ne.s32.totalorder %s126, %s140
    %p142 = scmp.eq.s32.totalorder %s20, 0
    %p143 = por %p141, %p142
    %s145 = sadd.s32 %s144, 1
    %p148 = scmp.eq.s32.totalorder %s14, 3
    %p149 = scmp.ne.s32.totalorder %s144, %s146
    %p150 = scmp.eq.s32.totalorder %s14, 0
    %p151 = por %p149, %p150
    %p152 = scmp.ne.s32.totalorder %s144, %s146
    %p153 = scmp.eq.s32.totalorder %s19, 3
    %p154 = por %p152, %p153
    %p155 = scmp.ne.s32.totalorder %s146, %s147
    %p156 = scmp.eq.s32.totalorder %s19, 0
    %p157 = por %p155, %p156
    %p158 = scmp.ne.s32.totalorder %s146, %s147
    %p159 = scmp.eq.s32.totalorder %s20, 3
    %p160 = por %p158, %p159
    %p162 = scmp.ne.s32.totalorder %s147, %s161
    %p163 = scmp.eq.s32.totalorder %s20, 0
    %p164 = por %p162, %p163
    %s166 = sadd.s32 %s165, 1
    %p169 = scmp.eq.s32.totalorder %s14, 3
    %p170 = scmp.ne.s32.totalorder %s165, %s167
    %p171 = scmp.eq.s32.totalorder %s14, 0
    %p172 = por %p170, %p171
    %p173 = scmp.ne.s32.totalorder %s165, %s167
    %p174 = scmp.eq.s32.totalorder %s19, 3
    %p175 = por %p173, %p174
    %p176 = scmp.ne.s32.totalorder %s167, %s168
    %p177 = scmp.eq.s32.totalorder %s19, 0
    %p178 = por %p176, %p177
    %p179 = scmp.ne.s32.totalorder %s167, %s168
    %p180 = scmp.eq.s32.totalorder %s20, 3
    %p181 = por %p179, %p180
    %p183 = scmp.ne.s32.totalorder %s168, %s182
    %p184 = scmp.eq.s32.totalorder %s20, 0
    %p185 = por %p183, %p184
    %s187 = sadd.s32 %s186, 1
    %p190 = scmp.eq.s32.totalorder %s14, 3
    %p191 = scmp.ne.s32.totalorder %s186, %s188
    %p192 = scmp.eq.s32.totalorder %s14, 0
    %p193 = por %p191, %p192
    %p194 = scmp.ne.s32.totalorder %s186, %s188
    %p195 = scmp.eq.s32.totalorder %s19, 3
    %p196 = por %p194, %p195
    %p197 = scmp.ne.s32.totalorder %s188, %s189
    %p198 = scmp.eq.s32.totalorder %s19, 0
    %p199 = por %p197, %p198
    %p200 = scmp.ne.s32.totalorder %s188, %s189
    %p201 = scmp.eq.s32.totalorder %s20, 3
    %p202 = por %p200, %p201
    %p204 = scmp.ne.s32.totalorder %s189, %s203
    %p205 = scmp.eq.s32.totalorder %s20, 0
    %p206 = por %p204, %p205
    %s207 = ssub.s32 %s21, %s33
    %s208 = ssub.s32 %s22, %s29
    %s209 = sor.u32 %s207, %s208
    %p210 = scmp.eq.s32.totalorder %s209, 0
    %s212 = sadd.s32 %s211, 1
    %s213 = scalar_select %p210, %s211, %s212
    %p216 = pneg %p210
    %p217 = scmp.eq.s32.totalorder %s14, 3
    %p218 = por %p216, %p217
    %p219 = scmp.ne.s32.totalorder %s211, %s214
    %p220 = scmp.eq.s32.totalorder %s14, 0
    %p221 = por %p219, %p220
    %p222 = scmp.ne.s32.totalorder %s211, %s214
    %p223 = scmp.eq.s32.totalorder %s19, 3
    %p224 = por %p222, %p223
    %p225 = scmp.ne.s32.totalorder %s214, %s215
    %p226 = scmp.eq.s32.totalorder %s19, 0
    %p227 = por %p225, %p226
    %p228 = scmp.ne.s32.totalorder %s214, %s215
    %p229 = scmp.eq.s32.totalorder %s20, 3
    %p230 = por %p228, %p229
    %p232 = scmp.ne.s32.totalorder %s215, %s231
    %p233 = scmp.eq.s32.totalorder %s20, 0
    %p234 = por %p232, %p233
    %p235 = scmp.le.s32.totalorder 1, %s14
    %p236 = scmp.lt.s32.totalorder %s14, 5
    %p237 = pnand %p235, %p236
    %p238 = pneg %p237
    // Predicated region
    $region9: #{learned_channel_self_attention_pooling.1} parent=5 // pred_check
      _
    $region10: #{learned_channel_self_attention_pooling.1} parent=5 // pred_check_branch
      %240 = sbr.rel (%p237) target = $region12
    $region11: #{learned_channel_self_attention_pooling.1} parent=5 // pred_region
      %s241 = ssub.s32 %s14, 1
      // Predicated region
      $region13: #{learned_channel_self_attention_pooling.1} parent=11 // pred_check
        %p242 = pneg %p73
      $region14: #{learned_channel_self_attention_pooling.1} parent=11 // pred_check_branch
        %244 = sbr.rel (%p242) target = $region16
      $region15: #{learned_channel_self_attention_pooling.1} parent=11 // pred_region
        _
      $region16: #{learned_channel_self_attention_pooling.1} parent=11 // pred_fallthru
        _
      // Predicated region
      $region17: #{learned_channel_self_attention_pooling.1} parent=11 // pred_check
        %p245 = pneg %p94
      $region18: #{learned_channel_self_attention_pooling.1} parent=11 // pred_check_branch
        %247 = sbr.rel (%p245) target = $region20
      $region19: #{learned_channel_self_attention_pooling.1} parent=11 // pred_region
        _
      $region20: #{learned_channel_self_attention_pooling.1} parent=11 // pred_fallthru
        _
      // Predicated region
      $region21: #{learned_channel_self_attention_pooling.1} parent=11 // pred_check
        %p248 = pneg %p115
      $region22: #{learned_channel_self_attention_pooling.1} parent=11 // pred_check_branch
        %250 = sbr.rel (%p248) target = $region24
      $region23: #{learned_channel_self_attention_pooling.1} parent=11 // pred_region
        _
      $region24: #{learned_channel_self_attention_pooling.1} parent=11 // pred_fallthru
        _
      // Predicated region
      $region25: #{learned_channel_self_attention_pooling.1} parent=11 // pred_check
        %p251 = pneg %p136
      $region26: #{learned_channel_self_attention_pooling.1} parent=11 // pred_check_branch
        %253 = sbr.rel (%p251) target = $region28
      $region27: #{learned_channel_self_attention_pooling.1} parent=11 // pred_region
        _
      $region28: #{learned_channel_self_attention_pooling.1} parent=11 // pred_fallthru
        _
      // Predicated region
      $region29: #{learned_channel_self_attention_pooling.1} parent=11 // pred_check
        %p254 = pneg %p157
      $region30: #{learned_channel_self_attention_pooling.1} parent=11 // pred_check_branch
        %256 = sbr.rel (%p254) target = $region32
      $region31: #{learned_channel_self_attention_pooling.1} parent=11 // pred_region
        _
      $region32: #{learned_channel_self_attention_pooling.1} parent=11 // pred_fallthru
        _
      // Predicated region
      $region33: #{learned_channel_self_attention_pooling.1} parent=11 // pred_check
        %p257 = pneg %p178
      $region34: #{learned_channel_self_attention_pooling.1} parent=11 // pred_check_branch
        %259 = sbr.rel (%p257) target = $region36
      $region35: #{learned_channel_self_attention_pooling.1} parent=11 // pred_region
        _
      $region36: #{learned_channel_self_attention_pooling.1} parent=11 // pred_fallthru
        _
      // Predicated region
      $region37: #{learned_channel_self_attention_pooling.1} parent=11 // pred_check
        %p260 = pneg %p199
      $region38: #{learned_channel_self_attention_pooling.1} parent=11 // pred_check_branch
        %262 = sbr.rel (%p260) target = $region40
      $region39: #{learned_channel_self_attention_pooling.1} parent=11 // pred_region
        _
      $region40: #{learned_channel_self_attention_pooling.1} parent=11 // pred_fallthru
        _
    $region12: #{learned_channel_self_attention_pooling.1} parent=5 // pred_fallthru
      _
    %p263 = scmp.lt.s32.totalorder %s14, 4
    // Predicated region
    $region41: #{learned_channel_self_attention_pooling.1} parent=5 // pred_check
      %p264 = pneg %p263
    $region42: #{learned_channel_self_attention_pooling.1} parent=5 // pred_check_branch
      %266 = sbr.rel (%p264) target = $region44
    $region43: #{learned_channel_self_attention_pooling.1} parent=5 // pred_region
      // Predicated region
      $region45: #{learned_channel_self_attention_pooling.1} parent=43 // pred_check
        %p267 = pneg %p46
      $region46: #{learned_channel_self_attention_pooling.1} parent=43 // pred_check_branch
        %269 = sbr.rel (%p267) target = $region48
      $region47: #{learned_channel_self_attention_pooling.1} parent=43 // pred_region
        %p270 = scmp.lt.s32.totalorder %s21, 1
        %s271 = scalar_select %p270, %s21, 1
        %s272 = smul.addr %s271, 32
        %s273 = smul.addr %s272, 8
        %s274 = scalar_lea.vmem %s0, %s273
      $region48: #{learned_channel_self_attention_pooling.1} parent=43 // pred_fallthru
        _
    $region44: #{learned_channel_self_attention_pooling.1} parent=5 // pred_fallthru
      _
    %p275 = scmp.le.s32.totalorder 1, %s14
    %p276 = scmp.lt.s32.totalorder %s14, 5
    %p277 = pnand %p275, %p276
    %p278 = pneg %p277
    // Predicated region
    $region49: #{learned_channel_self_attention_pooling.1} parent=5 // pred_check
      _
    $region50: #{learned_channel_self_attention_pooling.1} parent=5 // pred_check_branch
      %280 = sbr.rel (%p277) target = $region52
    $region51: #{learned_channel_self_attention_pooling.1} parent=5 // pred_region
      %s281 = ssub.s32 %s14, 1
      %p282 = scmp.lt.s32.totalorder %s23, 1
      %s283 = scalar_select %p282, %s23, 1
      %s284 = smul.addr %s283, 32
      %s285 = smul.addr %s284, 8
      %s286 = scalar_lea.vmem %s0, %s285
      %p287 = pneg %p52
      %p288 = pneg %p49
      %p289 = pneg %p73
      %p290 = pneg %p70
      %p291 = pneg %p94
      %p292 = pneg %p91
      %p293 = pneg %p115
      %p294 = pneg %p112
      %p295 = pneg %p136
      %p296 = pneg %p133
      %p297 = pneg %p157
      %p298 = pneg %p154
      %p299 = pneg %p178
      %p300 = pneg %p175
      %p301 = pneg %p199
      %p302 = pneg %p196
      %p303 = pneg %p227
      %p304 = pneg %p224
      %p305 = scmp.lt.s32.totalorder %s23, 1
      %s306 = scalar_select %p305, %s23, 1
      %p307 = scmp.lt.s32.totalorder %s24, 1
      %s308 = scalar_select %p307, %s24, 1
      %s309 = smul.addr %s306, 2
      %s310 = sadd.s32 %s308, %s309
      %s311 = smul.addr %s310, 4
      %s312 = scalar_lea.vmem %s8, %s311
      %p313 = scmp.lt.s32.totalorder %s23, 1
      %s314 = scalar_select %p313, %s23, 1
      %s315 = smul.addr %s314, 32
      %s316 = smul.addr %s315, 8
      %s317 = scalar_lea.vmem %s0, %s316
      %p318 = scmp.lt.s32.totalorder %s23, 1
      %s319 = scalar_select %p318, %s23, 1
      %p320 = scmp.lt.s32.totalorder %s24, 1
      %s321 = scalar_select %p320, %s24, 1
      %s322 = smul.addr %s319, 2
      %s323 = sadd.s32 %s321, %s322
      %s324 = smul.addr %s323, 4
      %s325 = scalar_lea.vmem %s8, %s324
      %p326 = scmp.eq.s32.totalorder %s24, 0
      // Predicated region
      $region53: #{learned_channel_self_attention_pooling.1} parent=51 // pred_check
        %p327 = pneg %p326
      $region54: #{learned_channel_self_attention_pooling.1} parent=51 // pred_check_branch
        %329 = sbr.rel (%p327) target = $region56
      $region55: #{learned_channel_self_attention_pooling.1} parent=51 // pred_region
        %v330 = vld [vmem:[%s317] sm:$0xff]
        %v331 = vld [vmem:[%s317 + $0x8] sm:$0xff]
        %v332 = vld [vmem:[%s317 + $0x10] sm:$0xff]
        %v333 = vld [vmem:[%s317 + $0x18] sm:$0xff]
        %v334 = vld [vmem:[%s317 + $0x20] sm:$0xff]
        %v335 = vld [vmem:[%s317 + $0x28] sm:$0xff]
        %v336 = vld [vmem:[%s317 + $0x30] sm:$0xff]
        %v337 = vld [vmem:[%s317 + $0x38] sm:$0xff]
        %v338 = vld [vmem:[%s317 + $0x40] sm:$0xff]
        %v339 = vld [vmem:[%s317 + $0x48] sm:$0xff]
        %v340 = vld [vmem:[%s317 + $0x50] sm:$0xff]
        %v341 = vld [vmem:[%s317 + $0x58] sm:$0xff]
        %v342 = vld [vmem:[%s317 + $0x60] sm:$0xff]
        %v343 = vld [vmem:[%s317 + $0x68] sm:$0xff]
        %v344 = vld [vmem:[%s317 + $0x70] sm:$0xff]
        %v345 = vld [vmem:[%s317 + $0x78] sm:$0xff]
        %v346 = vld [vmem:[%s317 + $0x80] sm:$0xff]
        %v347 = vld [vmem:[%s317 + $0x88] sm:$0xff]
        %v348 = vld [vmem:[%s317 + $0x90] sm:$0xff]
        %v349 = vld [vmem:[%s317 + $0x98] sm:$0xff]
        %v350 = vld [vmem:[%s317 + $0xa0] sm:$0xff]
        %v351 = vld [vmem:[%s317 + $0xa8] sm:$0xff]
        %v352 = vld [vmem:[%s317 + $0xb0] sm:$0xff]
        %v353 = vld [vmem:[%s317 + $0xb8] sm:$0xff]
        %v354 = vld [vmem:[%s317 + $0xc0] sm:$0xff]
        %v355 = vld [vmem:[%s317 + $0xc8] sm:$0xff]
        %v356 = vld [vmem:[%s317 + $0xd0] sm:$0xff]
        %v357 = vld [vmem:[%s317 + $0xd8] sm:$0xff]
        %v358 = vld [vmem:[%s317 + $0xe0] sm:$0xff]
        %v359 = vld [vmem:[%s317 + $0xe8] sm:$0xff]
        %v360 = vld [vmem:[%s317 + $0xf0] sm:$0xff]
        %v361 = vld [vmem:[%s317 + $0xf8] sm:$0xff]
        %v362 = vld [vmem:[%s3] sm:$0xff]
        %v363 = vld [vmem:[%s3 + $0x8] sm:$0xff]
        %v364 = vld [vmem:[%s4] sm:$0x1]
        %v366 = vperm.slane %v364, 0
        %vm368 = vcmask 130048
        %v370 = vsel %vm368, %v330, 0
        %v373 = vsel %vm368, %v331, 0
        %v376 = vsel %vm368, %v332, 0
        %v379 = vsel %vm368, %v333, 0
        %v382 = vsel %vm368, %v334, 0
        %v385 = vsel %vm368, %v335, 0
        %v388 = vsel %vm368, %v336, 0
        %v391 = vsel %vm368, %v337, 0
        %v394 = vsel %vm368, %v338, 0
        %v397 = vsel %vm368, %v339, 0
        %v400 = vsel %vm368, %v340, 0
        %v403 = vsel %vm368, %v341, 0
        %v406 = vsel %vm368, %v342, 0
        %v409 = vsel %vm368, %v343, 0
        %v412 = vsel %vm368, %v344, 0
        %v415 = vsel %vm368, %v345, 0
        %v418 = vsel %vm368, %v346, 0
        %v421 = vsel %vm368, %v347, 0
        %v424 = vsel %vm368, %v348, 0
        %v427 = vsel %vm368, %v349, 0
        %v430 = vsel %vm368, %v350, 0
        %v433 = vsel %vm368, %v351, 0
        %v436 = vsel %vm368, %v352, 0
        %v439 = vsel %vm368, %v353, 0
        %v442 = vsel %vm368, %v354, 0
        %v445 = vsel %vm368, %v355, 0
        %v448 = vsel %vm368, %v356, 0
        %v451 = vsel %vm368, %v357, 0
        %v454 = vsel %vm368, %v358, 0
        %v457 = vsel %vm368, %v359, 0
        %v460 = vsel %vm368, %v360, 0
        %v463 = vsel %vm368, %v361, 0
        %465 = vmatpush.msra.mxu0 0.0
        %466 = vmatpush.msra.mxu0 0.0
        %467 = vmatpush.msra.mxu0 0.0
        %468 = vmatpush.msra.mxu0 0.0
        %469 = vmatpush.msra.mxu0 0.0
        %470 = vmatpush.msra.mxu0 0.0
        %471 = vmatpush.msra.mxu0 0.0
        %472 = vmatpush.msra.mxu0 0.0
        %473 = vmatpush.msra.mxu0 0.0
        %474 = vmatpush.msra.mxu0 0.0
        %475 = vmatpush.msra.mxu0 0.0
        %476 = vmatpush.msra.mxu0 0.0
        %477 = vmatpush.msra.mxu0 0.0
        %478 = vmatpush.msra.mxu0 0.0
        %479 = vmatpush.msra.mxu0 %v363
        %480 = vmatpush.msra.mxu0 %v362
        %481 = vmatmul.f32.gmra.mxu0 %v370
        %v482 = vpop.f32.mrf.mxu0
        %v483 = vadd.f32 %v366, %v482
        %484 = vmatmul.f32.gmra.mxu0 %v373
        %v485 = vpop.f32.mrf.mxu0
        %v486 = vadd.f32 %v366, %v485
        %487 = vmatmul.f32.gmra.mxu0 %v376
        %v488 = vpop.f32.mrf.mxu0
        %v489 = vadd.f32 %v366, %v488
        %490 = vmatmul.f32.gmra.mxu0 %v379
        %v491 = vpop.f32.mrf.mxu0
        %v492 = vadd.f32 %v366, %v491
        %493 = vmatmul.f32.gmra.mxu0 %v382
        %v494 = vpop.f32.mrf.mxu0
        %v495 = vadd.f32 %v366, %v494
        %496 = vmatmul.f32.gmra.mxu0 %v385
        %v497 = vpop.f32.mrf.mxu0
        %v498 = vadd.f32 %v366, %v497
        %499 = vmatmul.f32.gmra.mxu0 %v388
        %v500 = vpop.f32.mrf.mxu0
        %v501 = vadd.f32 %v366, %v500
        %502 = vmatmul.f32.gmra.mxu0 %v391
        %v503 = vpop.f32.mrf.mxu0
        %v504 = vadd.f32 %v366, %v503
        %505 = vmatmul.f32.gmra.mxu0 %v394
        %v506 = vpop.f32.mrf.mxu0
        %v507 = vadd.f32 %v366, %v506
        %508 = vmatmul.f32.gmra.mxu0 %v397
        %v509 = vpop.f32.mrf.mxu0
        %v510 = vadd.f32 %v366, %v509
        %511 = vmatmul.f32.gmra.mxu0 %v400
        %v512 = vpop.f32.mrf.mxu0
        %v513 = vadd.f32 %v366, %v512
        %514 = vmatmul.f32.gmra.mxu0 %v403
        %v515 = vpop.f32.mrf.mxu0
        %v516 = vadd.f32 %v366, %v515
        %517 = vmatmul.f32.gmra.mxu0 %v406
        %v518 = vpop.f32.mrf.mxu0
        %v519 = vadd.f32 %v366, %v518
        %520 = vmatmul.f32.gmra.mxu0 %v409
        %v521 = vpop.f32.mrf.mxu0
        %v522 = vadd.f32 %v366, %v521
        %523 = vmatmul.f32.gmra.mxu0 %v412
        %v524 = vpop.f32.mrf.mxu0
        %v525 = vadd.f32 %v366, %v524
        %526 = vmatmul.f32.gmra.mxu0 %v415
        %v527 = vpop.f32.mrf.mxu0
        %v528 = vadd.f32 %v366, %v527
        %529 = vmatmul.f32.gmra.mxu0 %v418
        %v530 = vpop.f32.mrf.mxu0
        %v531 = vadd.f32 %v366, %v530
        %532 = vmatmul.f32.gmra.mxu0 %v421
        %v533 = vpop.f32.mrf.mxu0
        %v534 = vadd.f32 %v366, %v533
        %535 = vmatmul.f32.gmra.mxu0 %v424
        %v536 = vpop.f32.mrf.mxu0
        %v537 = vadd.f32 %v366, %v536
        %538 = vmatmul.f32.gmra.mxu0 %v427
        %v539 = vpop.f32.mrf.mxu0
        %v540 = vadd.f32 %v366, %v539
        %541 = vmatmul.f32.gmra.mxu0 %v430
        %v542 = vpop.f32.mrf.mxu0
        %v543 = vadd.f32 %v366, %v542
        %544 = vmatmul.f32.gmra.mxu0 %v433
        %v545 = vpop.f32.mrf.mxu0
        %v546 = vadd.f32 %v366, %v545
        %547 = vmatmul.f32.gmra.mxu0 %v436
        %v548 = vpop.f32.mrf.mxu0
        %v549 = vadd.f32 %v366, %v548
        %550 = vmatmul.f32.gmra.mxu0 %v439
        %v551 = vpop.f32.mrf.mxu0
        %v552 = vadd.f32 %v366, %v551
        %553 = vmatmul.f32.gmra.mxu0 %v442
        %v554 = vpop.f32.mrf.mxu0
        %v555 = vadd.f32 %v366, %v554
        %556 = vmatmul.f32.gmra.mxu0 %v445
        %v557 = vpop.f32.mrf.mxu0
        %v558 = vadd.f32 %v366, %v557
        %559 = vmatmul.f32.gmra.mxu0 %v448
        %v560 = vpop.f32.mrf.mxu0
        %v561 = vadd.f32 %v366, %v560
        %562 = vmatmul.f32.gmra.mxu0 %v451
        %v563 = vpop.f32.mrf.mxu0
        %v564 = vadd.f32 %v366, %v563
        %565 = vmatmul.f32.gmra.mxu0 %v454
        %v566 = vpop.f32.mrf.mxu0
        %v567 = vadd.f32 %v366, %v566
        %568 = vmatmul.f32.gmra.mxu0 %v457
        %v569 = vpop.f32.mrf.mxu0
        %v570 = vadd.f32 %v366, %v569
        %571 = vmatmul.f32.gmra.mxu0 %v460
        %v572 = vpop.f32.mrf.mxu0
        %v573 = vadd.f32 %v366, %v572
        %574 = vmatmul.f32.gmra.mxu0 %v463
        %v575 = vpop.f32.mrf.mxu0
        %v576 = vadd.f32 %v366, %v575
        %577 = vdwg.mxu0
        %578 = vst.msk [vmem:[#allocation2] sm:$0xff] %vm368, %v483
        %579 = vst.msk [vmem:[#allocation2 + $0x8] sm:$0xff] %vm368, %v486
        %580 = vst.msk [vmem:[#allocation2 + $0x10] sm:$0xff] %vm368, %v489
        %581 = vst.msk [vmem:[#allocation2 + $0x18] sm:$0xff] %vm368, %v492
        %582 = vst.msk [vmem:[#allocation2 + $0x20] sm:$0xff] %vm368, %v495
        %583 = vst.msk [vmem:[#allocation2 + $0x28] sm:$0xff] %vm368, %v498
        %584 = vst.msk [vmem:[#allocation2 + $0x30] sm:$0xff] %vm368, %v501
        %585 = vst.msk [vmem:[#allocation2 + $0x38] sm:$0xff] %vm368, %v504
        %586 = vst.msk [vmem:[#allocation2 + $0x40] sm:$0xff] %vm368, %v507
        %587 = vst.msk [vmem:[#allocation2 + $0x48] sm:$0xff] %vm368, %v510
        %588 = vst.msk [vmem:[#allocation2 + $0x50] sm:$0xff] %vm368, %v513
        %589 = vst.msk [vmem:[#allocation2 + $0x58] sm:$0xff] %vm368, %v516
        %590 = vst.msk [vmem:[#allocation2 + $0x60] sm:$0xff] %vm368, %v519
        %591 = vst.msk [vmem:[#allocation2 + $0x68] sm:$0xff] %vm368, %v522
        %592 = vst.msk [vmem:[#allocation2 + $0x70] sm:$0xff] %vm368, %v525
        %593 = vst.msk [vmem:[#allocation2 + $0x78] sm:$0xff] %vm368, %v528
        %594 = vst.msk [vmem:[#allocation2 + $0x80] sm:$0xff] %vm368, %v531
        %595 = vst.msk [vmem:[#allocation2 + $0x88] sm:$0xff] %vm368, %v534
        %596 = vst.msk [vmem:[#allocation2 + $0x90] sm:$0xff] %vm368, %v537
        %597 = vst.msk [vmem:[#allocation2 + $0x98] sm:$0xff] %vm368, %v540
        %598 = vst.msk [vmem:[#allocation2 + $0xa0] sm:$0xff] %vm368, %v543
        %599 = vst.msk [vmem:[#allocation2 + $0xa8] sm:$0xff] %vm368, %v546
        %600 = vst.msk [vmem:[#allocation2 + $0xb0] sm:$0xff] %vm368, %v549
        %601 = vst.msk [vmem:[#allocation2 + $0xb8] sm:$0xff] %vm368, %v552
        %602 = vst.msk [vmem:[#allocation2 + $0xc0] sm:$0xff] %vm368, %v555
        %603 = vst.msk [vmem:[#allocation2 + $0xc8] sm:$0xff] %vm368, %v558
        %604 = vst.msk [vmem:[#allocation2 + $0xd0] sm:$0xff] %vm368, %v561
        %605 = vst.msk [vmem:[#allocation2 + $0xd8] sm:$0xff] %vm368, %v564
        %606 = vst.msk [vmem:[#allocation2 + $0xe0] sm:$0xff] %vm368, %v567
        %607 = vst.msk [vmem:[#allocation2 + $0xe8] sm:$0xff] %vm368, %v570
        %608 = vst.msk [vmem:[#allocation2 + $0xf0] sm:$0xff] %vm368, %v573
        %609 = vst.msk [vmem:[#allocation2 + $0xf8] sm:$0xff] %vm368, %v576
        %v610 = vld [vmem:[%s5] sm:$0xff]
        %v611 = vld [vmem:[%s5 + $0x8] sm:$0xff]
        %v612 = vld [vmem:[%s6] sm:$0x1]
        %v614 = vperm.slane %v612, 0
        %616 = vmatpush.msra.mxu0 0.0
        %617 = vmatpush.msra.mxu0 0.0
        %618 = vmatpush.msra.mxu0 0.0
        %619 = vmatpush.msra.mxu0 0.0
        %620 = vmatpush.msra.mxu0 0.0
        %621 = vmatpush.msra.mxu0 0.0
        %622 = vmatpush.msra.mxu0 0.0
        %623 = vmatpush.msra.mxu0 0.0
        %624 = vmatpush.msra.mxu0 0.0
        %625 = vmatpush.msra.mxu0 0.0
        %626 = vmatpush.msra.mxu0 0.0
        %627 = vmatpush.msra.mxu0 0.0
        %628 = vmatpush.msra.mxu0 0.0
        %629 = vmatpush.msra.mxu0 0.0
        %630 = vmatpush.msra.mxu0 %v611
        %631 = vmatpush.msra.mxu0 %v610
        %632 = vmatmul.f32.gmra.mxu0 %v370
        %v633 = vpop.f32.mrf.mxu0
        %v634 = vadd.f32 %v614, %v633
        %635 = vmatmul.f32.gmra.mxu0 %v373
        %v636 = vpop.f32.mrf.mxu0
        %v637 = vadd.f32 %v614, %v636
        %638 = vmatmul.f32.gmra.mxu0 %v376
        %v639 = vpop.f32.mrf.mxu0
        %v640 = vadd.f32 %v614, %v639
        %641 = vmatmul.f32.gmra.mxu0 %v379
        %v642 = vpop.f32.mrf.mxu0
        %v643 = vadd.f32 %v614, %v642
        %644 = vmatmul.f32.gmra.mxu0 %v382
        %v645 = vpop.f32.mrf.mxu0
        %v646 = vadd.f32 %v614, %v645
        %647 = vmatmul.f32.gmra.mxu0 %v385
        %v648 = vpop.f32.mrf.mxu0
        %v649 = vadd.f32 %v614, %v648
        %650 = vmatmul.f32.gmra.mxu0 %v388
        %v651 = vpop.f32.mrf.mxu0
        %v652 = vadd.f32 %v614, %v651
        %653 = vmatmul.f32.gmra.mxu0 %v391
        %v654 = vpop.f32.mrf.mxu0
        %v655 = vadd.f32 %v614, %v654
        %656 = vmatmul.f32.gmra.mxu0 %v394
        %v657 = vpop.f32.mrf.mxu0
        %v658 = vadd.f32 %v614, %v657
        %659 = vmatmul.f32.gmra.mxu0 %v397
        %v660 = vpop.f32.mrf.mxu0
        %v661 = vadd.f32 %v614, %v660
        %662 = vmatmul.f32.gmra.mxu0 %v400
        %v663 = vpop.f32.mrf.mxu0
        %v664 = vadd.f32 %v614, %v663
        %665 = vmatmul.f32.gmra.mxu0 %v403
        %v666 = vpop.f32.mrf.mxu0
        %v667 = vadd.f32 %v614, %v666
        %668 = vmatmul.f32.gmra.mxu0 %v406
        %v669 = vpop.f32.mrf.mxu0
        %v670 = vadd.f32 %v614, %v669
        %671 = vmatmul.f32.gmra.mxu0 %v409
        %v672 = vpop.f32.mrf.mxu0
        %v673 = vadd.f32 %v614, %v672
        %674 = vmatmul.f32.gmra.mxu0 %v412
        %v675 = vpop.f32.mrf.mxu0
        %v676 = vadd.f32 %v614, %v675
        %677 = vmatmul.f32.gmra.mxu0 %v415
        %v678 = vpop.f32.mrf.mxu0
        %v679 = vadd.f32 %v614, %v678
        %680 = vmatmul.f32.gmra.mxu0 %v418
        %v681 = vpop.f32.mrf.mxu0
        %v682 = vadd.f32 %v614, %v681
        %683 = vmatmul.f32.gmra.mxu0 %v421
        %v684 = vpop.f32.mrf.mxu0
        %v685 = vadd.f32 %v614, %v684
        %686 = vmatmul.f32.gmra.mxu0 %v424
        %v687 = vpop.f32.mrf.mxu0
        %v688 = vadd.f32 %v614, %v687
        %689 = vmatmul.f32.gmra.mxu0 %v427
        %v690 = vpop.f32.mrf.mxu0
        %v691 = vadd.f32 %v614, %v690
        %692 = vmatmul.f32.gmra.mxu0 %v430
        %v693 = vpop.f32.mrf.mxu0
        %v694 = vadd.f32 %v614, %v693
        %695 = vmatmul.f32.gmra.mxu0 %v433
        %v696 = vpop.f32.mrf.mxu0
        %v697 = vadd.f32 %v614, %v696
        %698 = vmatmul.f32.gmra.mxu0 %v436
        %v699 = vpop.f32.mrf.mxu0
        %v700 = vadd.f32 %v614, %v699
        %701 = vmatmul.f32.gmra.mxu0 %v439
        %v702 = vpop.f32.mrf.mxu0
        %v703 = vadd.f32 %v614, %v702
        %704 = vmatmul.f32.gmra.mxu0 %v442
        %v705 = vpop.f32.mrf.mxu0
        %v706 = vadd.f32 %v614, %v705
        %707 = vmatmul.f32.gmra.mxu0 %v445
        %v708 = vpop.f32.mrf.mxu0
        %v709 = vadd.f32 %v614, %v708
        %710 = vmatmul.f32.gmra.mxu0 %v448
        %v711 = vpop.f32.mrf.mxu0
        %v712 = vadd.f32 %v614, %v711
        %713 = vmatmul.f32.gmra.mxu0 %v451
        %v714 = vpop.f32.mrf.mxu0
        %v715 = vadd.f32 %v614, %v714
        %716 = vmatmul.f32.gmra.mxu0 %v454
        %v717 = vpop.f32.mrf.mxu0
        %v718 = vadd.f32 %v614, %v717
        %719 = vmatmul.f32.gmra.mxu0 %v457
        %v720 = vpop.f32.mrf.mxu0
        %v721 = vadd.f32 %v614, %v720
        %722 = vmatmul.f32.gmra.mxu0 %v460
        %v723 = vpop.f32.mrf.mxu0
        %v724 = vadd.f32 %v614, %v723
        %725 = vmatmul.f32.gmra.mxu0 %v463
        %v726 = vpop.f32.mrf.mxu0
        %v727 = vadd.f32 %v614, %v726
        %728 = vdwg.mxu0
        %729 = vst.msk [vmem:[#allocation3] sm:$0xff] %vm368, %v634
        %730 = vst.msk [vmem:[#allocation3 + $0x8] sm:$0xff] %vm368, %v637
        %731 = vst.msk [vmem:[#allocation3 + $0x10] sm:$0xff] %vm368, %v640
        %732 = vst.msk [vmem:[#allocation3 + $0x18] sm:$0xff] %vm368, %v643
        %733 = vst.msk [vmem:[#allocation3 + $0x20] sm:$0xff] %vm368, %v646
        %734 = vst.msk [vmem:[#allocation3 + $0x28] sm:$0xff] %vm368, %v649
        %735 = vst.msk [vmem:[#allocation3 + $0x30] sm:$0xff] %vm368, %v652
        %736 = vst.msk [vmem:[#allocation3 + $0x38] sm:$0xff] %vm368, %v655
        %737 = vst.msk [vmem:[#allocation3 + $0x40] sm:$0xff] %vm368, %v658
        %738 = vst.msk [vmem:[#allocation3 + $0x48] sm:$0xff] %vm368, %v661
        %739 = vst.msk [vmem:[#allocation3 + $0x50] sm:$0xff] %vm368, %v664
        %740 = vst.msk [vmem:[#allocation3 + $0x58] sm:$0xff] %vm368, %v667
        %741 = vst.msk [vmem:[#allocation3 + $0x60] sm:$0xff] %vm368, %v670
        %742 = vst.msk [vmem:[#allocation3 + $0x68] sm:$0xff] %vm368, %v673
        %743 = vst.msk [vmem:[#allocation3 + $0x70] sm:$0xff] %vm368, %v676
        %744 = vst.msk [vmem:[#allocation3 + $0x78] sm:$0xff] %vm368, %v679
        %745 = vst.msk [vmem:[#allocation3 + $0x80] sm:$0xff] %vm368, %v682
        %746 = vst.msk [vmem:[#allocation3 + $0x88] sm:$0xff] %vm368, %v685
        %747 = vst.msk [vmem:[#allocation3 + $0x90] sm:$0xff] %vm368, %v688
        %748 = vst.msk [vmem:[#allocation3 + $0x98] sm:$0xff] %vm368, %v691
        %749 = vst.msk [vmem:[#allocation3 + $0xa0] sm:$0xff] %vm368, %v694
        %750 = vst.msk [vmem:[#allocation3 + $0xa8] sm:$0xff] %vm368, %v697
        %751 = vst.msk [vmem:[#allocation3 + $0xb0] sm:$0xff] %vm368, %v700
        %752 = vst.msk [vmem:[#allocation3 + $0xb8] sm:$0xff] %vm368, %v703
        %753 = vst.msk [vmem:[#allocation3 + $0xc0] sm:$0xff] %vm368, %v706
        %754 = vst.msk [vmem:[#allocation3 + $0xc8] sm:$0xff] %vm368, %v709
        %755 = vst.msk [vmem:[#allocation3 + $0xd0] sm:$0xff] %vm368, %v712
        %756 = vst.msk [vmem:[#allocation3 + $0xd8] sm:$0xff] %vm368, %v715
        %757 = vst.msk [vmem:[#allocation3 + $0xe0] sm:$0xff] %vm368, %v718
        %758 = vst.msk [vmem:[#allocation3 + $0xe8] sm:$0xff] %vm368, %v721
        %759 = vst.msk [vmem:[#allocation3 + $0xf0] sm:$0xff] %vm368, %v724
        %760 = vst.msk [vmem:[#allocation3 + $0xf8] sm:$0xff] %vm368, %v727
      $region56: #{learned_channel_self_attention_pooling.1} parent=51 // pred_fallthru
        _
      %s761 = smul.u32 %s24, 128
      %s762 = scalar_lea.vmem %s317, %s761
      %v763 = vld [vmem:[%s762] sm:$0xff]
      %v764 = vld [vmem:[%s762 + $0x8] sm:$0xff]
      %v765 = vld [vmem:[%s762 + $0x10] sm:$0xff]
      %v766 = vld [vmem:[%s762 + $0x18] sm:$0xff]
      %v767 = vld [vmem:[%s762 + $0x20] sm:$0xff]
      %v768 = vld [vmem:[%s762 + $0x28] sm:$0xff]
      %v769 = vld [vmem:[%s762 + $0x30] sm:$0xff]
      %v770 = vld [vmem:[%s762 + $0x38] sm:$0xff]
      %v771 = vld [vmem:[%s762 + $0x40] sm:$0xff]
      %v772 = vld [vmem:[%s762 + $0x48] sm:$0xff]
      %v773 = vld [vmem:[%s762 + $0x50] sm:$0xff]
      %v774 = vld [vmem:[%s762 + $0x58] sm:$0xff]
      %v775 = vld [vmem:[%s762 + $0x60] sm:$0xff]
      %v776 = vld [vmem:[%s762 + $0x68] sm:$0xff]
      %v777 = vld [vmem:[%s762 + $0x70] sm:$0xff]
      %v778 = vld [vmem:[%s762 + $0x78] sm:$0xff]
      %v779 = vld [vmem:[%s1] sm:$0xff]
      %v780 = vld [vmem:[%s1 + $0x8] sm:$0xff]
      %v781 = vld [vmem:[%s2] sm:$0x1]
      %v783 = vperm.slane %v781, 0
      %vm785 = vcmask 130048
      %v787 = vsel %vm785, %v763, 0
      %v790 = vsel %vm785, %v764, 0
      %v793 = vsel %vm785, %v765, 0
      %v796 = vsel %vm785, %v766, 0
      %v799 = vsel %vm785, %v767, 0
      %v802 = vsel %vm785, %v768, 0
      %v805 = vsel %vm785, %v769, 0
      %v808 = vsel %vm785, %v770, 0
      %v811 = vsel %vm785, %v771, 0
      %v814 = vsel %vm785, %v772, 0
      %v817 = vsel %vm785, %v773, 0
      %v820 = vsel %vm785, %v774, 0
      %v823 = vsel %vm785, %v775, 0
      %v826 = vsel %vm785, %v776, 0
      %v829 = vsel %vm785, %v777, 0
      %v832 = vsel %vm785, %v778, 0
      %834 = vmatpush.msra.mxu0 0.0
      %835 = vmatpush.msra.mxu0 0.0
      %836 = vmatpush.msra.mxu0 0.0
      %837 = vmatpush.msra.mxu0 0.0
      %838 = vmatpush.msra.mxu0 0.0
      %839 = vmatpush.msra.mxu0 0.0
      %840 = vmatpush.msra.mxu0 0.0
      %841 = vmatpush.msra.mxu0 0.0
      %842 = vmatpush.msra.mxu0 0.0
      %843 = vmatpush.msra.mxu0 0.0
      %844 = vmatpush.msra.mxu0 0.0
      %845 = vmatpush.msra.mxu0 0.0
      %846 = vmatpush.msra.mxu0 0.0
      %847 = vmatpush.msra.mxu0 0.0
      %848 = vmatpush.msra.mxu0 %v780
      %849 = vmatpush.msra.mxu0 %v779
      %850 = vmatmul.f32.gmra.mxu0 %v787
      %v851 = vpop.f32.mrf.mxu0
      %v852 = vadd.f32 %v783, %v851
      %853 = vmatmul.f32.gmra.mxu0 %v790
      %v854 = vpop.f32.mrf.mxu0
      %v855 = vadd.f32 %v783, %v854
      %856 = vmatmul.f32.gmra.mxu0 %v793
      %v857 = vpop.f32.mrf.mxu0
      %v858 = vadd.f32 %v783, %v857
      %859 = vmatmul.f32.gmra.mxu0 %v796
      %v860 = vpop.f32.mrf.mxu0
      %v861 = vadd.f32 %v783, %v860
      %862 = vmatmul.f32.gmra.mxu0 %v799
      %v863 = vpop.f32.mrf.mxu0
      %v864 = vadd.f32 %v783, %v863
      %865 = vmatmul.f32.gmra.mxu0 %v802
      %v866 = vpop.f32.mrf.mxu0
      %v867 = vadd.f32 %v783, %v866
      %868 = vmatmul.f32.gmra.mxu0 %v805
      %v869 = vpop.f32.mrf.mxu0
      %v870 = vadd.f32 %v783, %v869
      %871 = vmatmul.f32.gmra.mxu0 %v808
      %v872 = vpop.f32.mrf.mxu0
      %v873 = vadd.f32 %v783, %v872
      %874 = vmatmul.f32.gmra.mxu0 %v811
      %v875 = vpop.f32.mrf.mxu0
      %v876 = vadd.f32 %v783, %v875
      %877 = vmatmul.f32.gmra.mxu0 %v814
      %v878 = vpop.f32.mrf.mxu0
      %v879 = vadd.f32 %v783, %v878
      %880 = vmatmul.f32.gmra.mxu0 %v817
      %v881 = vpop.f32.mrf.mxu0
      %v882 = vadd.f32 %v783, %v881
      %883 = vmatmul.f32.gmra.mxu0 %v820
      %v884 = vpop.f32.mrf.mxu0
      %v885 = vadd.f32 %v783, %v884
      %886 = vmatmul.f32.gmra.mxu0 %v823
      %v887 = vpop.f32.mrf.mxu0
      %v888 = vadd.f32 %v783, %v887
      %889 = vmatmul.f32.gmra.mxu0 %v826
      %v890 = vpop.f32.mrf.mxu0
      %v891 = vadd.f32 %v783, %v890
      %892 = vmatmul.f32.gmra.mxu0 %v829
      %v893 = vpop.f32.mrf.mxu0
      %v894 = vadd.f32 %v783, %v893
      %895 = vmatmul.f32.gmra.mxu0 %v832
      %v896 = vpop.f32.mrf.mxu0
      %v897 = vadd.f32 %v783, %v896
      %898 = vdwg.mxu0
      %v899 = vld [vmem:[#allocation2] sm:$0xff]
      %v900 = vld [vmem:[#allocation2 + $0x8] sm:$0xff]
      %v901 = vld [vmem:[#allocation2 + $0x10] sm:$0xff]
      %v902 = vld [vmem:[#allocation2 + $0x18] sm:$0xff]
      %v903 = vld [vmem:[#allocation2 + $0x20] sm:$0xff]
      %v904 = vld [vmem:[#allocation2 + $0x28] sm:$0xff]
      %v905 = vld [vmem:[#allocation2 + $0x30] sm:$0xff]
      %v906 = vld [vmem:[#allocation2 + $0x38] sm:$0xff]
      %v907 = vld [vmem:[#allocation2 + $0x40] sm:$0xff]
      %v908 = vld [vmem:[#allocation2 + $0x48] sm:$0xff]
      %v909 = vld [vmem:[#allocation2 + $0x50] sm:$0xff]
      %v910 = vld [vmem:[#allocation2 + $0x58] sm:$0xff]
      %v911 = vld [vmem:[#allocation2 + $0x60] sm:$0xff]
      %v912 = vld [vmem:[#allocation2 + $0x68] sm:$0xff]
      %v913 = vld [vmem:[#allocation2 + $0x70] sm:$0xff]
      %v914 = vld [vmem:[#allocation2 + $0x78] sm:$0xff]
      %v915 = vld [vmem:[#allocation2 + $0x80] sm:$0xff]
      %v916 = vld [vmem:[#allocation2 + $0x88] sm:$0xff]
      %v917 = vld [vmem:[#allocation2 + $0x90] sm:$0xff]
      %v918 = vld [vmem:[#allocation2 + $0x98] sm:$0xff]
      %v919 = vld [vmem:[#allocation2 + $0xa0] sm:$0xff]
      %v920 = vld [vmem:[#allocation2 + $0xa8] sm:$0xff]
      %v921 = vld [vmem:[#allocation2 + $0xb0] sm:$0xff]
      %v922 = vld [vmem:[#allocation2 + $0xb8] sm:$0xff]
      %v923 = vld [vmem:[#allocation2 + $0xc0] sm:$0xff]
      %v924 = vld [vmem:[#allocation2 + $0xc8] sm:$0xff]
      %v925 = vld [vmem:[#allocation2 + $0xd0] sm:$0xff]
      %v926 = vld [vmem:[#allocation2 + $0xd8] sm:$0xff]
      %v927 = vld [vmem:[#allocation2 + $0xe0] sm:$0xff]
      %v928 = vld [vmem:[#allocation2 + $0xe8] sm:$0xff]
      %v929 = vld [vmem:[#allocation2 + $0xf0] sm:$0xff]
      %v930 = vld [vmem:[#allocation2 + $0xf8] sm:$0xff]
      %v932 = vsel %vm785, %v852, 0
      %v935 = vsel %vm785, %v855, 0
      %v938 = vsel %vm785, %v858, 0
      %v941 = vsel %vm785, %v861, 0
      %v944 = vsel %vm785, %v864, 0
      %v947 = vsel %vm785, %v867, 0
      %v950 = vsel %vm785, %v870, 0
      %v953 = vsel %vm785, %v873, 0
      %v956 = vsel %vm785, %v876, 0
      %v959 = vsel %vm785, %v879, 0
      %v962 = vsel %vm785, %v882, 0
      %v965 = vsel %vm785, %v885, 0
      %v968 = vsel %vm785, %v888, 0
      %v971 = vsel %vm785, %v891, 0
      %v974 = vsel %vm785, %v894, 0
      %v977 = vsel %vm785, %v897, 0
      %v980 = vsel %vm785, %v899, 0
      %v983 = vsel %vm785, %v900, 0
      %v986 = vsel %vm785, %v901, 0
      %v989 = vsel %vm785, %v902, 0
      %v992 = vsel %vm785, %v903, 0
      %v995 = vsel %vm785, %v904, 0
      %v998 = vsel %vm785, %v905, 0
      %v1001 = vsel %vm785, %v906, 0
      %v1004 = vsel %vm785, %v907, 0
      %v1007 = vsel %vm785, %v908, 0
      %v1010 = vsel %vm785, %v909, 0
      %v1013 = vsel %vm785, %v910, 0
      %v1016 = vsel %vm785, %v911, 0
      %v1019 = vsel %vm785, %v912, 0
      %v1022 = vsel %vm785, %v913, 0
      %v1025 = vsel %vm785, %v914, 0
      %v1028 = vsel %vm785, %v915, 0
      %v1031 = vsel %vm785, %v916, 0
      %v1034 = vsel %vm785, %v917, 0
      %v1037 = vsel %vm785, %v918, 0
      %v1040 = vsel %vm785, %v919, 0
      %v1043 = vsel %vm785, %v920, 0
      %v1046 = vsel %vm785, %v921, 0
      %v1049 = vsel %vm785, %v922, 0
      %v1052 = vsel %vm785, %v923, 0
      %v1055 = vsel %vm785, %v924, 0
      %v1058 = vsel %vm785, %v925, 0
      %v1061 = vsel %vm785, %v926, 0
      %v1064 = vsel %vm785, %v927, 0
      %v1067 = vsel %vm785, %v928, 0
      %v1070 = vsel %vm785, %v929, 0
      %v1073 = vsel %vm785, %v930, 0
      %1075 = vmatpush.xpose.msra.mxu0 %v1025
      %1076 = vmatpush.xpose.msra.mxu0 %v1022
      %1077 = vmatpush.xpose.msra.mxu0 %v1019
      %1078 = vmatpush.xpose.msra.mxu0 %v1016
      %1079 = vmatpush.xpose.msra.mxu0 %v1013
      %1080 = vmatpush.xpose.msra.mxu0 %v1010
      %1081 = vmatpush.xpose.msra.mxu0 %v1007
      %1082 = vmatpush.xpose.msra.mxu0 %v1004
      %1083 = vmatpush.xpose.msra.mxu0 %v1001
      %1084 = vmatpush.xpose.msra.mxu0 %v998
      %1085 = vmatpush.xpose.msra.mxu0 %v995
      %1086 = vmatpush.xpose.msra.mxu0 %v992
      %1087 = vmatpush.xpose.msra.mxu0 %v989
      %1088 = vmatpush.xpose.msra.mxu0 %v986
      %1089 = vmatpush.xpose.msra.mxu0 %v983
      %1090 = vmatpush.xpose.msra.mxu0 %v980
      %1091 = vmatmul.f32.gmra.mxu0 %v932
      %v1092 = vpop.f32.mrf.mxu0
      %v1093 = vadd.f32 0.0, %v1092
      %1094 = vmatmul.f32.gmra.mxu0 %v935
      %v1095 = vpop.f32.mrf.mxu0
      %v1096 = vadd.f32 0.0, %v1095
      %1097 = vmatmul.f32.gmra.mxu0 %v938
      %v1098 = vpop.f32.mrf.mxu0
      %v1099 = vadd.f32 0.0, %v1098
      %1100 = vmatmul.f32.gmra.mxu0 %v941
      %v1101 = vpop.f32.mrf.mxu0
      %v1102 = vadd.f32 0.0, %v1101
      %1103 = vmatmul.f32.gmra.mxu0 %v944
      %v1104 = vpop.f32.mrf.mxu0
      %v1105 = vadd.f32 0.0, %v1104
      %1106 = vmatmul.f32.gmra.mxu0 %v947
      %v1107 = vpop.f32.mrf.mxu0
      %v1108 = vadd.f32 0.0, %v1107
      %1109 = vmatmul.f32.gmra.mxu0 %v950
      %v1110 = vpop.f32.mrf.mxu0
      %v1111 = vadd.f32 0.0, %v1110
      %1112 = vmatmul.f32.gmra.mxu0 %v953
      %v1113 = vpop.f32.mrf.mxu0
      %v1114 = vadd.f32 0.0, %v1113
      %1115 = vmatmul.f32.gmra.mxu0 %v956
      %v1116 = vpop.f32.mrf.mxu0
      %v1117 = vadd.f32 0.0, %v1116
      %1118 = vmatmul.f32.gmra.mxu0 %v959
      %v1119 = vpop.f32.mrf.mxu0
      %v1120 = vadd.f32 0.0, %v1119
      %1121 = vmatmul.f32.gmra.mxu0 %v962
      %v1122 = vpop.f32.mrf.mxu0
      %v1123 = vadd.f32 0.0, %v1122
      %1124 = vmatmul.f32.gmra.mxu0 %v965
      %v1125 = vpop.f32.mrf.mxu0
      %v1126 = vadd.f32 0.0, %v1125
      %1127 = vmatmul.f32.gmra.mxu0 %v968
      %v1128 = vpop.f32.mrf.mxu0
      %v1129 = vadd.f32 0.0, %v1128
      %1130 = vmatmul.f32.gmra.mxu0 %v971
      %v1131 = vpop.f32.mrf.mxu0
      %v1132 = vadd.f32 0.0, %v1131
      %1133 = vmatmul.f32.gmra.mxu0 %v974
      %v1134 = vpop.f32.mrf.mxu0
      %v1135 = vadd.f32 0.0, %v1134
      %1136 = vmatmul.f32.gmra.mxu0 %v977
      %v1137 = vpop.f32.mrf.mxu0
      %v1138 = vadd.f32 0.0, %v1137
      %1139 = vdwg.mxu0
      %1140 = vmatpush.xpose.msra.mxu0 %v1073
      %1141 = vmatpush.xpose.msra.mxu0 %v1070
      %1142 = vmatpush.xpose.msra.mxu0 %v1067
      %1143 = vmatpush.xpose.msra.mxu0 %v1064
      %1144 = vmatpush.xpose.msra.mxu0 %v1061
      %1145 = vmatpush.xpose.msra.mxu0 %v1058
      %1146 = vmatpush.xpose.msra.mxu0 %v1055
      %1147 = vmatpush.xpose.msra.mxu0 %v1052
      %1148 = vmatpush.xpose.msra.mxu0 %v1049
      %1149 = vmatpush.xpose.msra.mxu0 %v1046
      %1150 = vmatpush.xpose.msra.mxu0 %v1043
      %1151 = vmatpush.xpose.msra.mxu0 %v1040
      %1152 = vmatpush.xpose.msra.mxu0 %v1037
      %1153 = vmatpush.xpose.msra.mxu0 %v1034
      %1154 = vmatpush.xpose.msra.mxu0 %v1031
      %1155 = vmatpush.xpose.msra.mxu0 %v1028
      %1156 = vmatmul.f32.gmra.mxu0 %v932
      %v1157 = vpop.f32.mrf.mxu0
      %v1158 = vadd.f32 0.0, %v1157
      %1159 = vmatmul.f32.gmra.mxu0 %v935
      %v1160 = vpop.f32.mrf.mxu0
      %v1161 = vadd.f32 0.0, %v1160
      %1162 = vmatmul.f32.gmra.mxu0 %v938
      %v1163 = vpop.f32.mrf.mxu0
      %v1164 = vadd.f32 0.0, %v1163
      %1165 = vmatmul.f32.gmra.mxu0 %v941
      %v1166 = vpop.f32.mrf.mxu0
      %v1167 = vadd.f32 0.0, %v1166
      %1168 = vmatmul.f32.gmra.mxu0 %v944
      %v1169 = vpop.f32.mrf.mxu0
      %v1170 = vadd.f32 0.0, %v1169
      %1171 = vmatmul.f32.gmra.mxu0 %v947
      %v1172 = vpop.f32.mrf.mxu0
      %v1173 = vadd.f32 0.0, %v1172
      %1174 = vmatmul.f32.gmra.mxu0 %v950
      %v1175 = vpop.f32.mrf.mxu0
      %v1176 = vadd.f32 0.0, %v1175
      %1177 = vmatmul.f32.gmra.mxu0 %v953
      %v1178 = vpop.f32.mrf.mxu0
      %v1179 = vadd.f32 0.0, %v1178
      %1180 = vmatmul.f32.gmra.mxu0 %v956
      %v1181 = vpop.f32.mrf.mxu0
      %v1182 = vadd.f32 0.0, %v1181
      %1183 = vmatmul.f32.gmra.mxu0 %v959
      %v1184 = vpop.f32.mrf.mxu0
      %v1185 = vadd.f32 0.0, %v1184
      %1186 = vmatmul.f32.gmra.mxu0 %v962
      %v1187 = vpop.f32.mrf.mxu0
      %v1188 = vadd.f32 0.0, %v1187
      %1189 = vmatmul.f32.gmra.mxu0 %v965
      %v1190 = vpop.f32.mrf.mxu0
      %v1191 = vadd.f32 0.0, %v1190
      %1192 = vmatmul.f32.gmra.mxu0 %v968
      %v1193 = vpop.f32.mrf.mxu0
      %v1194 = vadd.f32 0.0, %v1193
      %1195 = vmatmul.f32.gmra.mxu0 %v971
      %v1196 = vpop.f32.mrf.mxu0
      %v1197 = vadd.f32 0.0, %v1196
      %1198 = vmatmul.f32.gmra.mxu0 %v974
      %v1199 = vpop.f32.mrf.mxu0
      %v1200 = vadd.f32 0.0, %v1199
      %1201 = vmatmul.f32.gmra.mxu0 %v977
      %v1202 = vpop.f32.mrf.mxu0
      %v1203 = vadd.f32 0.0, %v1202
      %1204 = vdwg.mxu0
      %v1205 = vmax.f32 %v1093, %v1158
      %1206 = vmax.xlane.f32.xlu0 %v1205
      %v1207 = vpop.xlane.xlu0 %1206
      %v1208 = vmax.f32 %v1096, %v1161
      %1209 = vmax.xlane.f32.xlu0 %v1208
      %v1210 = vpop.xlane.xlu0 %1209
      %v1211 = vmax.f32 %v1099, %v1164
      %1212 = vmax.xlane.f32.xlu0 %v1211
      %v1213 = vpop.xlane.xlu0 %1212
      %v1214 = vmax.f32 %v1102, %v1167
      %1215 = vmax.xlane.f32.xlu0 %v1214
      %v1216 = vpop.xlane.xlu0 %1215
      %v1217 = vmax.f32 %v1105, %v1170
      %1218 = vmax.xlane.f32.xlu0 %v1217
      %v1219 = vpop.xlane.xlu0 %1218
      %v1220 = vmax.f32 %v1108, %v1173
      %1221 = vmax.xlane.f32.xlu0 %v1220
      %v1222 = vpop.xlane.xlu0 %1221
      %v1223 = vmax.f32 %v1111, %v1176
      %1224 = vmax.xlane.f32.xlu0 %v1223
      %v1225 = vpop.xlane.xlu0 %1224
      %v1226 = vmax.f32 %v1114, %v1179
      %1227 = vmax.xlane.f32.xlu0 %v1226
      %v1228 = vpop.xlane.xlu0 %1227
      %v1229 = vmax.f32 %v1117, %v1182
      %1230 = vmax.xlane.f32.xlu0 %v1229
      %v1231 = vpop.xlane.xlu0 %1230
      %v1232 = vmax.f32 %v1120, %v1185
      %1233 = vmax.xlane.f32.xlu0 %v1232
      %v1234 = vpop.xlane.xlu0 %1233
      %v1235 = vmax.f32 %v1123, %v1188
      %1236 = vmax.xlane.f32.xlu0 %v1235
      %v1237 = vpop.xlane.xlu0 %1236
      %v1238 = vmax.f32 %v1126, %v1191
      %1239 = vmax.xlane.f32.xlu0 %v1238
      %v1240 = vpop.xlane.xlu0 %1239
      %v1241 = vmax.f32 %v1129, %v1194
      %1242 = vmax.xlane.f32.xlu0 %v1241
      %v1243 = vpop.xlane.xlu0 %1242
      %v1244 = vmax.f32 %v1132, %v1197
      %1245 = vmax.xlane.f32.xlu0 %v1244
      %v1246 = vpop.xlane.xlu0 %1245
      %v1247 = vmax.f32 %v1135, %v1200
      %1248 = vmax.xlane.f32.xlu0 %v1247
      %v1249 = vpop.xlane.xlu0 %1248
      %v1250 = vmax.f32 %v1138, %v1203
      %1251 = vmax.xlane.f32.xlu0 %v1250
      %v1252 = vpop.xlane.xlu0 %1251
      %v1253 = vsub.f32 %v1093, %v1207
      %v1254 = vsub.f32 %v1158, %v1207
      %v1255 = vsub.f32 %v1096, %v1210
      %v1256 = vsub.f32 %v1161, %v1210
      %v1257 = vsub.f32 %v1099, %v1213
      %v1258 = vsub.f32 %v1164, %v1213
      %v1259 = vsub.f32 %v1102, %v1216
      %v1260 = vsub.f32 %v1167, %v1216
      %v1261 = vsub.f32 %v1105, %v1219
      %v1262 = vsub.f32 %v1170, %v1219
      %v1263 = vsub.f32 %v1108, %v1222
      %v1264 = vsub.f32 %v1173, %v1222
      %v1265 = vsub.f32 %v1111, %v1225
      %v1266 = vsub.f32 %v1176, %v1225
      %v1267 = vsub.f32 %v1114, %v1228
      %v1268 = vsub.f32 %v1179, %v1228
      %v1269 = vsub.f32 %v1117, %v1231
      %v1270 = vsub.f32 %v1182, %v1231
      %v1271 = vsub.f32 %v1120, %v1234
      %v1272 = vsub.f32 %v1185, %v1234
      %v1273 = vsub.f32 %v1123, %v1237
      %v1274 = vsub.f32 %v1188, %v1237
      %v1275 = vsub.f32 %v1126, %v1240
      %v1276 = vsub.f32 %v1191, %v1240
      %v1277 = vsub.f32 %v1129, %v1243
      %v1278 = vsub.f32 %v1194, %v1243
      %v1279 = vsub.f32 %v1132, %v1246
      %v1280 = vsub.f32 %v1197, %v1246
      %v1281 = vsub.f32 %v1135, %v1249
      %v1282 = vsub.f32 %v1200, %v1249
      %v1283 = vsub.f32 %v1138, %v1252
      %v1284 = vsub.f32 %v1203, %v1252
      %v1285 = vmul.f32 %v1253, 1.442695
      %v1286 = vpow.pop %v1285
      %v1287 = vmul.f32 %v1254, 1.442695
      %v1288 = vpow.pop %v1287
      %v1289 = vmul.f32 %v1255, 1.442695
      %v1290 = vpow.pop %v1289
      %v1291 = vmul.f32 %v1256, 1.442695
      %v1292 = vpow.pop %v1291
      %v1293 = vmul.f32 %v1257, 1.442695
      %v1294 = vpow.pop %v1293
      %v1295 = vmul.f32 %v1258, 1.442695
      %v1296 = vpow.pop %v1295
      %v1297 = vmul.f32 %v1259, 1.442695
      %v1298 = vpow.pop %v1297
      %v1299 = vmul.f32 %v1260, 1.442695
      %v1300 = vpow.pop %v1299
      %v1301 = vmul.f32 %v1261, 1.442695
      %v1302 = vpow.pop %v1301
      %v1303 = vmul.f32 %v1262, 1.442695
      %v1304 = vpow.pop %v1303
      %v1305 = vmul.f32 %v1263, 1.442695
      %v1306 = vpow.pop %v1305
      %v1307 = vmul.f32 %v1264, 1.442695
      %v1308 = vpow.pop %v1307
      %v1309 = vmul.f32 %v1265, 1.442695
      %v1310 = vpow.pop %v1309
      %v1311 = vmul.f32 %v1266, 1.442695
      %v1312 = vpow.pop %v1311
      %v1313 = vmul.f32 %v1267, 1.442695
      %v1314 = vpow.pop %v1313
      %v1315 = vmul.f32 %v1268, 1.442695
      %v1316 = vpow.pop %v1315
      %v1317 = vmul.f32 %v1269, 1.442695
      %v1318 = vpow.pop %v1317
      %v1319 = vmul.f32 %v1270, 1.442695
      %v1320 = vpow.pop %v1319
      %v1321 = vmul.f32 %v1271, 1.442695
      %v1322 = vpow.pop %v1321
      %v1323 = vmul.f32 %v1272, 1.442695
      %v1324 = vpow.pop %v1323
      %v1325 = vmul.f32 %v1273, 1.442695
      %v1326 = vpow.pop %v1325
      %v1327 = vmul.f32 %v1274, 1.442695
      %v1328 = vpow.pop %v1327
      %v1329 = vmul.f32 %v1275, 1.442695
      %v1330 = vpow.pop %v1329
      %v1331 = vmul.f32 %v1276, 1.442695
      %v1332 = vpow.pop %v1331
      %v1333 = vmul.f32 %v1277, 1.442695
      %v1334 = vpow.pop %v1333
      %v1335 = vmul.f32 %v1278, 1.442695
      %v1336 = vpow.pop %v1335
      %v1337 = vmul.f32 %v1279, 1.442695
      %v1338 = vpow.pop %v1337
      %v1339 = vmul.f32 %v1280, 1.442695
      %v1340 = vpow.pop %v1339
      %v1341 = vmul.f32 %v1281, 1.442695
      %v1342 = vpow.pop %v1341
      %v1343 = vmul.f32 %v1282, 1.442695
      %v1344 = vpow.pop %v1343
      %v1345 = vmul.f32 %v1283, 1.442695
      %v1346 = vpow.pop %v1345
      %v1347 = vmul.f32 %v1284, 1.442695
      %v1348 = vpow.pop %v1347
      %v1349 = vadd.f32 %v1286, %v1288
      %1350 = vadd.xlane.f32.xlu0 %v1349
      %v1351 = vpop.xlane.xlu0 %1350
      %v1352 = vadd.f32 %v1290, %v1292
      %1353 = vadd.xlane.f32.xlu0 %v1352
      %v1354 = vpop.xlane.xlu0 %1353
      %v1355 = vadd.f32 %v1294, %v1296
      %1356 = vadd.xlane.f32.xlu0 %v1355
      %v1357 = vpop.xlane.xlu0 %1356
      %v1358 = vadd.f32 %v1298, %v1300
      %1359 = vadd.xlane.f32.xlu0 %v1358
      %v1360 = vpop.xlane.xlu0 %1359
      %v1361 = vadd.f32 %v1302, %v1304
      %1362 = vadd.xlane.f32.xlu0 %v1361
      %v1363 = vpop.xlane.xlu0 %1362
      %v1364 = vadd.f32 %v1306, %v1308
      %1365 = vadd.xlane.f32.xlu0 %v1364
      %v1366 = vpop.xlane.xlu0 %1365
      %v1367 = vadd.f32 %v1310, %v1312
      %1368 = vadd.xlane.f32.xlu0 %v1367
      %v1369 = vpop.xlane.xlu0 %1368
      %v1370 = vadd.f32 %v1314, %v1316
      %1371 = vadd.xlane.f32.xlu0 %v1370
      %v1372 = vpop.xlane.xlu0 %1371
      %v1373 = vadd.f32 %v1318, %v1320
      %1374 = vadd.xlane.f32.xlu0 %v1373
      %v1375 = vpop.xlane.xlu0 %1374
      %v1376 = vadd.f32 %v1322, %v1324
      %1377 = vadd.xlane.f32.xlu0 %v1376
      %v1378 = vpop.xlane.xlu0 %1377
      %v1379 = vadd.f32 %v1326, %v1328
      %1380 = vadd.xlane.f32.xlu0 %v1379
      %v1381 = vpop.xlane.xlu0 %1380
      %v1382 = vadd.f32 %v1330, %v1332
      %1383 = vadd.xlane.f32.xlu0 %v1382
      %v1384 = vpop.xlane.xlu0 %1383
      %v1385 = vadd.f32 %v1334, %v1336
      %1386 = vadd.xlane.f32.xlu0 %v1385
      %v1387 = vpop.xlane.xlu0 %1386
      %v1388 = vadd.f32 %v1338, %v1340
      %1389 = vadd.xlane.f32.xlu0 %v1388
      %v1390 = vpop.xlane.xlu0 %1389
      %v1391 = vadd.f32 %v1342, %v1344
      %1392 = vadd.xlane.f32.xlu0 %v1391
      %v1393 = vpop.xlane.xlu0 %1392
      %v1394 = vadd.f32 %v1346, %v1348
      %1395 = vadd.xlane.f32.xlu0 %v1394
      %v1396 = vpop.xlane.xlu0 %1395
      %v1397 = vld [vmem:[#allocation3] sm:$0xff]
      %v1398 = vld [vmem:[#allocation3 + $0x8] sm:$0xff]
      %v1399 = vld [vmem:[#allocation3 + $0x10] sm:$0xff]
      %v1400 = vld [vmem:[#allocation3 + $0x18] sm:$0xff]
      %v1401 = vld [vmem:[#allocation3 + $0x20] sm:$0xff]
      %v1402 = vld [vmem:[#allocation3 + $0x28] sm:$0xff]
      %v1403 = vld [vmem:[#allocation3 + $0x30] sm:$0xff]
      %v1404 = vld [vmem:[#allocation3 + $0x38] sm:$0xff]
      %v1405 = vld [vmem:[#allocation3 + $0x40] sm:$0xff]
      %v1406 = vld [vmem:[#allocation3 + $0x48] sm:$0xff]
      %v1407 = vld [vmem:[#allocation3 + $0x50] sm:$0xff]
      %v1408 = vld [vmem:[#allocation3 + $0x58] sm:$0xff]
      %v1409 = vld [vmem:[#allocation3 + $0x60] sm:$0xff]
      %v1410 = vld [vmem:[#allocation3 + $0x68] sm:$0xff]
      %v1411 = vld [vmem:[#allocation3 + $0x70] sm:$0xff]
      %v1412 = vld [vmem:[#allocation3 + $0x78] sm:$0xff]
      %v1413 = vld [vmem:[#allocation3 + $0x80] sm:$0xff]
      %v1414 = vld [vmem:[#allocation3 + $0x88] sm:$0xff]
      %v1415 = vld [vmem:[#allocation3 + $0x90] sm:$0xff]
      %v1416 = vld [vmem:[#allocation3 + $0x98] sm:$0xff]
      %v1417 = vld [vmem:[#allocation3 + $0xa0] sm:$0xff]
      %v1418 = vld [vmem:[#allocation3 + $0xa8] sm:$0xff]
      %v1419 = vld [vmem:[#allocation3 + $0xb0] sm:$0xff]
      %v1420 = vld [vmem:[#allocation3 + $0xb8] sm:$0xff]
      %v1421 = vld [vmem:[#allocation3 + $0xc0] sm:$0xff]
      %v1422 = vld [vmem:[#allocation3 + $0xc8] sm:$0xff]
      %v1423 = vld [vmem:[#allocation3 + $0xd0] sm:$0xff]
      %v1424 = vld [vmem:[#allocation3 + $0xd8] sm:$0xff]
      %v1425 = vld [vmem:[#allocation3 + $0xe0] sm:$0xff]
      %v1426 = vld [vmem:[#allocation3 + $0xe8] sm:$0xff]
      %v1427 = vld [vmem:[#allocation3 + $0xf0] sm:$0xff]
      %v1428 = vld [vmem:[#allocation3 + $0xf8] sm:$0xff]
      %1429 = vmatpush.msra.mxu0 %v1412
      %1430 = vmatpush.msra.mxu0 %v1411
      %1431 = vmatpush.msra.mxu0 %v1410
      %1432 = vmatpush.msra.mxu0 %v1409
      %1433 = vmatpush.msra.mxu0 %v1408
      %1434 = vmatpush.msra.mxu0 %v1407
      %1435 = vmatpush.msra.mxu0 %v1406
      %1436 = vmatpush.msra.mxu0 %v1405
      %1437 = vmatpush.msra.mxu0 %v1404
      %1438 = vmatpush.msra.mxu0 %v1403
      %1439 = vmatpush.msra.mxu0 %v1402
      %1440 = vmatpush.msra.mxu0 %v1401
      %1441 = vmatpush.msra.mxu0 %v1400
      %1442 = vmatpush.msra.mxu0 %v1399
      %1443 = vmatpush.msra.mxu0 %v1398
      %1444 = vmatpush.msra.mxu0 %v1397
      %1445 = vmatmul.f32.gmra.mxu0 %v1286
      %v1446 = vpop.f32.mrf.mxu0
      %v1447 = vadd.f32 0.0, %v1446
      %1448 = vmatmul.f32.gmra.mxu0 %v1290
      %v1449 = vpop.f32.mrf.mxu0
      %v1450 = vadd.f32 0.0, %v1449
      %1451 = vmatmul.f32.gmra.mxu0 %v1294
      %v1452 = vpop.f32.mrf.mxu0
      %v1453 = vadd.f32 0.0, %v1452
      %1454 = vmatmul.f32.gmra.mxu0 %v1298
      %v1455 = vpop.f32.mrf.mxu0
      %v1456 = vadd.f32 0.0, %v1455
      %1457 = vmatmul.f32.gmra.mxu0 %v1302
      %v1458 = vpop.f32.mrf.mxu0
      %v1459 = vadd.f32 0.0, %v1458
      %1460 = vmatmul.f32.gmra.mxu0 %v1306
      %v1461 = vpop.f32.mrf.mxu0
      %v1462 = vadd.f32 0.0, %v1461
      %1463 = vmatmul.f32.gmra.mxu0 %v1310
      %v1464 = vpop.f32.mrf.mxu0
      %v1465 = vadd.f32 0.0, %v1464
      %1466 = vmatmul.f32.gmra.mxu0 %v1314
      %v1467 = vpop.f32.mrf.mxu0
      %v1468 = vadd.f32 0.0, %v1467
      %1469 = vmatmul.f32.gmra.mxu0 %v1318
      %v1470 = vpop.f32.mrf.mxu0
      %v1471 = vadd.f32 0.0, %v1470
      %1472 = vmatmul.f32.gmra.mxu0 %v1322
      %v1473 = vpop.f32.mrf.mxu0
      %v1474 = vadd.f32 0.0, %v1473
      %1475 = vmatmul.f32.gmra.mxu0 %v1326
      %v1476 = vpop.f32.mrf.mxu0
      %v1477 = vadd.f32 0.0, %v1476
      %1478 = vmatmul.f32.gmra.mxu0 %v1330
      %v1479 = vpop.f32.mrf.mxu0
      %v1480 = vadd.f32 0.0, %v1479
      %1481 = vmatmul.f32.gmra.mxu0 %v1334
      %v1482 = vpop.f32.mrf.mxu0
      %v1483 = vadd.f32 0.0, %v1482
      %1484 = vmatmul.f32.gmra.mxu0 %v1338
      %v1485 = vpop.f32.mrf.mxu0
      %v1486 = vadd.f32 0.0, %v1485
      %1487 = vmatmul.f32.gmra.mxu0 %v1342
      %v1488 = vpop.f32.mrf.mxu0
      %v1489 = vadd.f32 0.0, %v1488
      %1490 = vmatmul.f32.gmra.mxu0 %v1346
      %v1491 = vpop.f32.mrf.mxu0
      %v1492 = vadd.f32 0.0, %v1491
      %1493 = vdwg.mxu0
      %1494 = vmatpush.msra.mxu0 %v1428
      %1495 = vmatpush.msra.mxu0 %v1427
      %1496 = vmatpush.msra.mxu0 %v1426
      %1497 = vmatpush.msra.mxu0 %v1425
      %1498 = vmatpush.msra.mxu0 %v1424
      %1499 = vmatpush.msra.mxu0 %v1423
      %1500 = vmatpush.msra.mxu0 %v1422
      %1501 = vmatpush.msra.mxu0 %v1421
      %1502 = vmatpush.msra.mxu0 %v1420
      %1503 = vmatpush.msra.mxu0 %v1419
      %1504 = vmatpush.msra.mxu0 %v1418
      %1505 = vmatpush.msra.mxu0 %v1417
      %1506 = vmatpush.msra.mxu0 %v1416
      %1507 = vmatpush.msra.mxu0 %v1415
      %1508 = vmatpush.msra.mxu0 %v1414
      %1509 = vmatpush.msra.mxu0 %v1413
      %1510 = vmatmul.f32.gmra.mxu0 %v1288
      %v1511 = vpop.f32.mrf.mxu0
      %v1512 = vadd.f32 %v1447, %v1511
      %1513 = vmatmul.f32.gmra.mxu0 %v1292
      %v1514 = vpop.f32.mrf.mxu0
      %v1515 = vadd.f32 %v1450, %v1514
      %1516 = vmatmul.f32.gmra.mxu0 %v1296
      %v1517 = vpop.f32.mrf.mxu0
      %v1518 = vadd.f32 %v1453, %v1517
      %1519 = vmatmul.f32.gmra.mxu0 %v1300
      %v1520 = vpop.f32.mrf.mxu0
      %v1521 = vadd.f32 %v1456, %v1520
      %1522 = vmatmul.f32.gmra.mxu0 %v1304
      %v1523 = vpop.f32.mrf.mxu0
      %v1524 = vadd.f32 %v1459, %v1523
      %1525 = vmatmul.f32.gmra.mxu0 %v1308
      %v1526 = vpop.f32.mrf.mxu0
      %v1527 = vadd.f32 %v1462, %v1526
      %1528 = vmatmul.f32.gmra.mxu0 %v1312
      %v1529 = vpop.f32.mrf.mxu0
      %v1530 = vadd.f32 %v1465, %v1529
      %1531 = vmatmul.f32.gmra.mxu0 %v1316
      %v1532 = vpop.f32.mrf.mxu0
      %v1533 = vadd.f32 %v1468, %v1532
      %1534 = vmatmul.f32.gmra.mxu0 %v1320
      %v1535 = vpop.f32.mrf.mxu0
      %v1536 = vadd.f32 %v1471, %v1535
      %1537 = vmatmul.f32.gmra.mxu0 %v1324
      %v1538 = vpop.f32.mrf.mxu0
      %v1539 = vadd.f32 %v1474, %v1538
      %1540 = vmatmul.f32.gmra.mxu0 %v1328
      %v1541 = vpop.f32.mrf.mxu0
      %v1542 = vadd.f32 %v1477, %v1541
      %1543 = vmatmul.f32.gmra.mxu0 %v1332
      %v1544 = vpop.f32.mrf.mxu0
      %v1545 = vadd.f32 %v1480, %v1544
      %1546 = vmatmul.f32.gmra.mxu0 %v1336
      %v1547 = vpop.f32.mrf.mxu0
      %v1548 = vadd.f32 %v1483, %v1547
      %1549 = vmatmul.f32.gmra.mxu0 %v1340
      %v1550 = vpop.f32.mrf.mxu0
      %v1551 = vadd.f32 %v1486, %v1550
      %1552 = vmatmul.f32.gmra.mxu0 %v1344
      %v1553 = vpop.f32.mrf.mxu0
      %v1554 = vadd.f32 %v1489, %v1553
      %1555 = vmatmul.f32.gmra.mxu0 %v1348
      %v1556 = vpop.f32.mrf.mxu0
      %v1557 = vadd.f32 %v1492, %v1556
      %1558 = vdwg.mxu0
      %v1559 = vrcp.pop %v1351
      %v1560 = vmul.f32 %v1351, %v1559
      %v1561 = vsub.f32 1.0, %v1560
      %v1562 = vmul.f32 %v1559, %v1561
      %v1563 = vadd.f32 %v1559, %v1562
      %vm1564 = vweird.f32 %v1351
      %vm1565 = vweird.f32 %v1559
      %vm1566 = vmor %vm1564, %vm1565
      %v1567 = vsel %vm1566, %v1559, %v1563
      %v1568 = vand.u32 2147483647, %v1351
      %vm1569 = vcmp.eq.f32.partialorder %v1568, 8.507059e+37
      %v1570 = vand.u32 %v1351, 2147483648
      %v1571 = vor.u32 1.1754944e-38, %v1570
      %v1572 = vsel %vm1569, %v1571, %v1567
      %v1573 = vrcp.pop %v1354
      %v1574 = vmul.f32 %v1354, %v1573
      %v1575 = vsub.f32 1.0, %v1574
      %v1576 = vmul.f32 %v1573, %v1575
      %v1577 = vadd.f32 %v1573, %v1576
      %vm1578 = vweird.f32 %v1354
      %vm1579 = vweird.f32 %v1573
      %vm1580 = vmor %vm1578, %vm1579
      %v1581 = vsel %vm1580, %v1573, %v1577
      %v1582 = vand.u32 2147483647, %v1354
      %vm1583 = vcmp.eq.f32.partialorder %v1582, 8.507059e+37
      %v1584 = vand.u32 %v1354, 2147483648
      %v1585 = vor.u32 1.1754944e-38, %v1584
      %v1586 = vsel %vm1583, %v1585, %v1581
      %v1587 = vrcp.pop %v1357
      %v1588 = vmul.f32 %v1357, %v1587
      %v1589 = vsub.f32 1.0, %v1588
      %v1590 = vmul.f32 %v1587, %v1589
      %v1591 = vadd.f32 %v1587, %v1590
      %vm1592 = vweird.f32 %v1357
      %vm1593 = vweird.f32 %v1587
      %vm1594 = vmor %vm1592, %vm1593
      %v1595 = vsel %vm1594, %v1587, %v1591
      %v1596 = vand.u32 2147483647, %v1357
      %vm1597 = vcmp.eq.f32.partialorder %v1596, 8.507059e+37
      %v1598 = vand.u32 %v1357, 2147483648
      %v1599 = vor.u32 1.1754944e-38, %v1598
      %v1600 = vsel %vm1597, %v1599, %v1595
      %v1601 = vrcp.pop %v1360
      %v1602 = vmul.f32 %v1360, %v1601
      %v1603 = vsub.f32 1.0, %v1602
      %v1604 = vmul.f32 %v1601, %v1603
      %v1605 = vadd.f32 %v1601, %v1604
      %vm1606 = vweird.f32 %v1360
      %vm1607 = vweird.f32 %v1601
      %vm1608 = vmor %vm1606, %vm1607
      %v1609 = vsel %vm1608, %v1601, %v1605
      %v1610 = vand.u32 2147483647, %v1360
      %vm1611 = vcmp.eq.f32.partialorder %v1610, 8.507059e+37
      %v1612 = vand.u32 %v1360, 2147483648
      %v1613 = vor.u32 1.1754944e-38, %v1612
      %v1614 = vsel %vm1611, %v1613, %v1609
      %v1615 = vrcp.pop %v1363
      %v1616 = vmul.f32 %v1363, %v1615
      %v1617 = vsub.f32 1.0, %v1616
      %v1618 = vmul.f32 %v1615, %v1617
      %v1619 = vadd.f32 %v1615, %v1618
      %vm1620 = vweird.f32 %v1363
      %vm1621 = vweird.f32 %v1615
      %vm1622 = vmor %vm1620, %vm1621
      %v1623 = vsel %vm1622, %v1615, %v1619
      %v1624 = vand.u32 2147483647, %v1363
      %vm1625 = vcmp.eq.f32.partialorder %v1624, 8.507059e+37
      %v1626 = vand.u32 %v1363, 2147483648
      %v1627 = vor.u32 1.1754944e-38, %v1626
      %v1628 = vsel %vm1625, %v1627, %v1623
      %v1629 = vrcp.pop %v1366
      %v1630 = vmul.f32 %v1366, %v1629
      %v1631 = vsub.f32 1.0, %v1630
      %v1632 = vmul.f32 %v1629, %v1631
      %v1633 = vadd.f32 %v1629, %v1632
      %vm1634 = vweird.f32 %v1366
      %vm1635 = vweird.f32 %v1629
      %vm1636 = vmor %vm1634, %vm1635
      %v1637 = vsel %vm1636, %v1629, %v1633
      %v1638 = vand.u32 2147483647, %v1366
      %vm1639 = vcmp.eq.f32.partialorder %v1638, 8.507059e+37
      %v1640 = vand.u32 %v1366, 2147483648
      %v1641 = vor.u32 1.1754944e-38, %v1640
      %v1642 = vsel %vm1639, %v1641, %v1637
      %v1643 = vrcp.pop %v1369
      %v1644 = vmul.f32 %v1369, %v1643
      %v1645 = vsub.f32 1.0, %v1644
      %v1646 = vmul.f32 %v1643, %v1645
      %v1647 = vadd.f32 %v1643, %v1646
      %vm1648 = vweird.f32 %v1369
      %vm1649 = vweird.f32 %v1643
      %vm1650 = vmor %vm1648, %vm1649
      %v1651 = vsel %vm1650, %v1643, %v1647
      %v1652 = vand.u32 2147483647, %v1369
      %vm1653 = vcmp.eq.f32.partialorder %v1652, 8.507059e+37
      %v1654 = vand.u32 %v1369, 2147483648
      %v1655 = vor.u32 1.1754944e-38, %v1654
      %v1656 = vsel %vm1653, %v1655, %v1651
      %v1657 = vrcp.pop %v1372
      %v1658 = vmul.f32 %v1372, %v1657
      %v1659 = vsub.f32 1.0, %v1658
      %v1660 = vmul.f32 %v1657, %v1659
      %v1661 = vadd.f32 %v1657, %v1660
      %vm1662 = vweird.f32 %v1372
      %vm1663 = vweird.f32 %v1657
      %vm1664 = vmor %vm1662, %vm1663
      %v1665 = vsel %vm1664, %v1657, %v1661
      %v1666 = vand.u32 2147483647, %v1372
      %vm1667 = vcmp.eq.f32.partialorder %v1666, 8.507059e+37
      %v1668 = vand.u32 %v1372, 2147483648
      %v1669 = vor.u32 1.1754944e-38, %v1668
      %v1670 = vsel %vm1667, %v1669, %v1665
      %v1671 = vrcp.pop %v1375
      %v1672 = vmul.f32 %v1375, %v1671
      %v1673 = vsub.f32 1.0, %v1672
      %v1674 = vmul.f32 %v1671, %v1673
      %v1675 = vadd.f32 %v1671, %v1674
      %vm1676 = vweird.f32 %v1375
      %vm1677 = vweird.f32 %v1671
      %vm1678 = vmor %vm1676, %vm1677
      %v1679 = vsel %vm1678, %v1671, %v1675
      %v1680 = vand.u32 2147483647, %v1375
      %vm1681 = vcmp.eq.f32.partialorder %v1680, 8.507059e+37
      %v1682 = vand.u32 %v1375, 2147483648
      %v1683 = vor.u32 1.1754944e-38, %v1682
      %v1684 = vsel %vm1681, %v1683, %v1679
      %v1685 = vrcp.pop %v1378
      %v1686 = vmul.f32 %v1378, %v1685
      %v1687 = vsub.f32 1.0, %v1686
      %v1688 = vmul.f32 %v1685, %v1687
      %v1689 = vadd.f32 %v1685, %v1688
      %vm1690 = vweird.f32 %v1378
      %vm1691 = vweird.f32 %v1685
      %vm1692 = vmor %vm1690, %vm1691
      %v1693 = vsel %vm1692, %v1685, %v1689
      %v1694 = vand.u32 2147483647, %v1378
      %vm1695 = vcmp.eq.f32.partialorder %v1694, 8.507059e+37
      %v1696 = vand.u32 %v1378, 2147483648
      %v1697 = vor.u32 1.1754944e-38, %v1696
      %v1698 = vsel %vm1695, %v1697, %v1693
      %v1699 = vrcp.pop %v1381
      %v1700 = vmul.f32 %v1381, %v1699
      %v1701 = vsub.f32 1.0, %v1700
      %v1702 = vmul.f32 %v1699, %v1701
      %v1703 = vadd.f32 %v1699, %v1702
      %vm1704 = vweird.f32 %v1381
      %vm1705 = vweird.f32 %v1699
      %vm1706 = vmor %vm1704, %vm1705
      %v1707 = vsel %vm1706, %v1699, %v1703
      %v1708 = vand.u32 2147483647, %v1381
      %vm1709 = vcmp.eq.f32.partialorder %v1708, 8.507059e+37
      %v1710 = vand.u32 %v1381, 2147483648
      %v1711 = vor.u32 1.1754944e-38, %v1710
      %v1712 = vsel %vm1709, %v1711, %v1707
      %v1713 = vrcp.pop %v1384
      %v1714 = vmul.f32 %v1384, %v1713
      %v1715 = vsub.f32 1.0, %v1714
      %v1716 = vmul.f32 %v1713, %v1715
      %v1717 = vadd.f32 %v1713, %v1716
      %vm1718 = vweird.f32 %v1384
      %vm1719 = vweird.f32 %v1713
      %vm1720 = vmor %vm1718, %vm1719
      %v1721 = vsel %vm1720, %v1713, %v1717
      %v1722 = vand.u32 2147483647, %v1384
      %vm1723 = vcmp.eq.f32.partialorder %v1722, 8.507059e+37
      %v1724 = vand.u32 %v1384, 2147483648
      %v1725 = vor.u32 1.1754944e-38, %v1724
      %v1726 = vsel %vm1723, %v1725, %v1721
      %v1727 = vrcp.pop %v1387
      %v1728 = vmul.f32 %v1387, %v1727
      %v1729 = vsub.f32 1.0, %v1728
      %v1730 = vmul.f32 %v1727, %v1729
      %v1731 = vadd.f32 %v1727, %v1730
      %vm1732 = vweird.f32 %v1387
      %vm1733 = vweird.f32 %v1727
      %vm1734 = vmor %vm1732, %vm1733
      %v1735 = vsel %vm1734, %v1727, %v1731
      %v1736 = vand.u32 2147483647, %v1387
      %vm1737 = vcmp.eq.f32.partialorder %v1736, 8.507059e+37
      %v1738 = vand.u32 %v1387, 2147483648
      %v1739 = vor.u32 1.1754944e-38, %v1738
      %v1740 = vsel %vm1737, %v1739, %v1735
      %v1741 = vrcp.pop %v1390
      %v1742 = vmul.f32 %v1390, %v1741
      %v1743 = vsub.f32 1.0, %v1742
      %v1744 = vmul.f32 %v1741, %v1743
      %v1745 = vadd.f32 %v1741, %v1744
      %vm1746 = vweird.f32 %v1390
      %vm1747 = vweird.f32 %v1741
      %vm1748 = vmor %vm1746, %vm1747
      %v1749 = vsel %vm1748, %v1741, %v1745
      %v1750 = vand.u32 2147483647, %v1390
      %vm1751 = vcmp.eq.f32.partialorder %v1750, 8.507059e+37
      %v1752 = vand.u32 %v1390, 2147483648
      %v1753 = vor.u32 1.1754944e-38, %v1752
      %v1754 = vsel %vm1751, %v1753, %v1749
      %v1755 = vrcp.pop %v1393
      %v1756 = vmul.f32 %v1393, %v1755
      %v1757 = vsub.f32 1.0, %v1756
      %v1758 = vmul.f32 %v1755, %v1757
      %v1759 = vadd.f32 %v1755, %v1758
      %vm1760 = vweird.f32 %v1393
      %vm1761 = vweird.f32 %v1755
      %vm1762 = vmor %vm1760, %vm1761
      %v1763 = vsel %vm1762, %v1755, %v1759
      %v1764 = vand.u32 2147483647, %v1393
      %vm1765 = vcmp.eq.f32.partialorder %v1764, 8.507059e+37
      %v1766 = vand.u32 %v1393, 2147483648
      %v1767 = vor.u32 1.1754944e-38, %v1766
      %v1768 = vsel %vm1765, %v1767, %v1763
      %v1769 = vrcp.pop %v1396
      %v1770 = vmul.f32 %v1396, %v1769
      %v1771 = vsub.f32 1.0, %v1770
      %v1772 = vmul.f32 %v1769, %v1771
      %v1773 = vadd.f32 %v1769, %v1772
      %vm1774 = vweird.f32 %v1396
      %vm1775 = vweird.f32 %v1769
      %vm1776 = vmor %vm1774, %vm1775
      %v1777 = vsel %vm1776, %v1769, %v1773
      %v1778 = vand.u32 2147483647, %v1396
      %vm1779 = vcmp.eq.f32.partialorder %v1778, 8.507059e+37
      %v1780 = vand.u32 %v1396, 2147483648
      %v1781 = vor.u32 1.1754944e-38, %v1780
      %v1782 = vsel %vm1779, %v1781, %v1777
      %v1783 = vmul.f32 %v1512, %v1572
      %v1784 = vmul.f32 %v1515, %v1586
      %v1785 = vmul.f32 %v1518, %v1600
      %v1786 = vmul.f32 %v1521, %v1614
      %v1787 = vmul.f32 %v1524, %v1628
      %v1788 = vmul.f32 %v1527, %v1642
      %v1789 = vmul.f32 %v1530, %v1656
      %v1790 = vmul.f32 %v1533, %v1670
      %v1791 = vmul.f32 %v1536, %v1684
      %v1792 = vmul.f32 %v1539, %v1698
      %v1793 = vmul.f32 %v1542, %v1712
      %v1794 = vmul.f32 %v1545, %v1726
      %v1795 = vmul.f32 %v1548, %v1740
      %v1796 = vmul.f32 %v1551, %v1754
      %v1797 = vmul.f32 %v1554, %v1768
      %v1798 = vmul.f32 %v1557, %v1782
      %v1799 = vmul.f32 %v763, %v1783
      %v1800 = vmul.f32 %v764, %v1784
      %v1801 = vmul.f32 %v765, %v1785
      %v1802 = vmul.f32 %v766, %v1786
      %v1803 = vmul.f32 %v767, %v1787
      %v1804 = vmul.f32 %v768, %v1788
      %v1805 = vmul.f32 %v769, %v1789
      %v1806 = vmul.f32 %v770, %v1790
      %v1807 = vmul.f32 %v771, %v1791
      %v1808 = vmul.f32 %v772, %v1792
      %v1809 = vmul.f32 %v773, %v1793
      %v1810 = vmul.f32 %v774, %v1794
      %v1811 = vmul.f32 %v775, %v1795
      %v1812 = vmul.f32 %v776, %v1796
      %v1813 = vmul.f32 %v777, %v1797
      %v1814 = vmul.f32 %v778, %v1798
      %v1815 = vld [vmem:[%s7] sm:$0xf]
      %v1817 = vsel %vm785, %v1815, 0
      %v1820 = vsel %vm785, %v1799, 0
      %v1823 = vsel %vm785, %v1800, 0
      %v1826 = vsel %vm785, %v1801, 0
      %v1829 = vsel %vm785, %v1802, 0
      %v1832 = vsel %vm785, %v1803, 0
      %v1835 = vsel %vm785, %v1804, 0
      %v1838 = vsel %vm785, %v1805, 0
      %v1841 = vsel %vm785, %v1806, 0
      %v1844 = vsel %vm785, %v1807, 0
      %v1847 = vsel %vm785, %v1808, 0
      %v1850 = vsel %vm785, %v1809, 0
      %v1853 = vsel %vm785, %v1810, 0
      %v1856 = vsel %vm785, %v1811, 0
      %v1859 = vsel %vm785, %v1812, 0
      %v1862 = vsel %vm785, %v1813, 0
      %v1865 = vsel %vm785, %v1814, 0
      %1867 = vmatpush.xpose.msra.mxu0 %v1865
      %1868 = vmatpush.xpose.msra.mxu0 %v1862
      %1869 = vmatpush.xpose.msra.mxu0 %v1859
      %1870 = vmatpush.xpose.msra.mxu0 %v1856
      %1871 = vmatpush.xpose.msra.mxu0 %v1853
      %1872 = vmatpush.xpose.msra.mxu0 %v1850
      %1873 = vmatpush.xpose.msra.mxu0 %v1847
      %1874 = vmatpush.xpose.msra.mxu0 %v1844
      %1875 = vmatpush.xpose.msra.mxu0 %v1841
      %1876 = vmatpush.xpose.msra.mxu0 %v1838
      %1877 = vmatpush.xpose.msra.mxu0 %v1835
      %1878 = vmatpush.xpose.msra.mxu0 %v1832
      %1879 = vmatpush.xpose.msra.mxu0 %v1829
      %1880 = vmatpush.xpose.msra.mxu0 %v1826
      %1881 = vmatpush.xpose.msra.mxu0 %v1823
      %1882 = vmatpush.xpose.msra.mxu0 %v1820
      %1883 = vmatmul.f32.gmra.mxu0 %v1817
      %v1884 = vpop.f32.mrf.mxu0
      %v1885 = vadd.f32 0.0, %v1884
      %1886 = vdwg.mxu0
      %1887 = vst [vmem:[%s325] sm:$0xf] %v1885
      %p1888 = scmp.lt.s32.totalorder %s23, 1
      %s1889 = scalar_select %p1888, %s23, 1
      %p1890 = scmp.lt.s32.totalorder %s24, 1
      %s1891 = scalar_select %p1890, %s24, 1
      %s1892 = smul.addr %s1889, 2
      %s1893 = sadd.s32 %s1891, %s1892
      %s1894 = smul.addr %s1893, 4
      %s1895 = scalar_lea.vmem %s8, %s1894
      // Predicated region
      $region57: #{learned_channel_self_attention_pooling.1} parent=51 // pred_check
        %p1896 = pneg %p224
      $region58: #{learned_channel_self_attention_pooling.1} parent=51 // pred_check_branch
        %1898 = sbr.rel (%p1896) target = $region60
      $region59: #{learned_channel_self_attention_pooling.1} parent=51 // pred_region
        _
      $region60: #{learned_channel_self_attention_pooling.1} parent=51 // pred_fallthru
        _
    $region52: #{learned_channel_self_attention_pooling.1} parent=5 // pred_fallthru
      _
    %p1899 = scmp.le.s32.totalorder 2, %s14
    // Predicated region
    $region61: #{learned_channel_self_attention_pooling.1} parent=5 // pred_check
      %p1900 = pneg %p1899
    $region62: #{learned_channel_self_attention_pooling.1} parent=5 // pred_check_branch
      %1902 = sbr.rel (%p1900) target = $region64
    $region63: #{learned_channel_self_attention_pooling.1} parent=5 // pred_region
      %s1903 = ssub.s32 %s14, 2
      // Predicated region
      $region65: #{learned_channel_self_attention_pooling.1} parent=63 // pred_check
        %p1904 = pneg %p230
      $region66: #{learned_channel_self_attention_pooling.1} parent=63 // pred_check_branch
        %1906 = sbr.rel (%p1904) target = $region68
      $region67: #{learned_channel_self_attention_pooling.1} parent=63 // pred_region
        %p1907 = scmp.lt.s32.totalorder %s25, 1
        %s1908 = scalar_select %p1907, %s25, 1
        %p1909 = scmp.lt.s32.totalorder %s26, 1
        %s1910 = scalar_select %p1909, %s26, 1
        %s1911 = smul.addr %s1908, 2
        %s1912 = sadd.s32 %s1910, %s1911
        %s1913 = smul.addr %s1912, 4
        %s1914 = scalar_lea.vmem %s8, %s1913
      $region68: #{learned_channel_self_attention_pooling.1} parent=63 // pred_fallthru
        _
    $region64: #{learned_channel_self_attention_pooling.1} parent=5 // pred_fallthru
      _
  $region6: #{learned_channel_self_attention_pooling.1} parent=0 // loop_footer
    %s18 = sadd.s32 1, %s14
  $region7: #{learned_channel_self_attention_pooling.1} parent=0 // loop_footer_branch
    %13 = sbr.rel target = $region3
  $region8: #{learned_channel_self_attention_pooling.1} parent=0 // loop_exit
    _

</llo_original>
